<compile_context>
chip_gen: v6e
topology: v6e:2x2x1
jax: 0.10.0
libtpu: 0.0.40
codegen_flags: <defaults>
</compile_context>

<pallas_src>
import functools

import jax
import jax.numpy as jnp
from jax import lax
from jax.experimental import pallas as pl
from jax.experimental.pallas import tpu as pltpu


def _dw_gn_pw_kernel(xf_ref, wdw_ref, bdw_ref, gnw_ref, gnb_ref, wpw_ref, bpw_ref,
                     o_ref, *, Nb, C, O, H, W, K, pad, groups, eps):
    """Fused depthwise conv + GroupNorm + 1x1 conv for a block of Nb samples.

    xf_ref : (Nb, C, F)   H-padded, flattened input, F = (H+2*pad)*W + 2*pad   (VMEM)
    wdw_ref: (K*K, C, 1)  depthwise tap weights                                 (VMEM)
    bdw_ref: (C, 1)       depthwise bias                                        (VMEM)
    gnw_ref: (C, 1), gnb_ref: (C, 1)  GroupNorm affine                          (VMEM)
    wpw_ref: (O, C)       1x1 conv weight (scalars)                             (SMEM)
    bpw_ref: (O,)         1x1 conv bias (scalars)                               (SMEM)
    o_ref  : (Nb, O, H*W) output block (lane-dense)                             (VMEM)
    """
    HW = H * W
    cpg = C // groups
    inv_n = 1.0 / float(cpg * HW)

    # column (w) index of every flattened output position, for W-halo masking
    col = lax.broadcasted_iota(jnp.int32, (1, 1, HW), 2) % W

    # ---- 1) depthwise KxK conv: taps grouped by column displacement d = kw - pad ----
    def column_sum(kw):
        csum = None
        for kh in range(K):
            s = kh * W + kw                                      # static lane offset
            win = xf_ref[:, :, s:s + HW].astype(jnp.float32)     # (Nb, C, HW) slice-load
            term = win * wdw_ref[kh * K + kw]                    # (C, 1) per-channel tap
            csum = term if csum is None else csum + term
        return csum

    acc = column_sum(pad)                                        # center column: no mask
    for kw in range(K):
        d = kw - pad
        if d == 0:
            continue
        valid = (col + d >= 0) & (col + d < W)                   # ONE mask per column group
        acc = acc + jnp.where(valid, column_sum(kw), 0.0)
    dw = acc + bdw_ref[...]                                      # (Nb, C, HW)

    # ---- 2) GroupNorm, vectorized across groups (single-pass sums, clamped variance) ----
    s1 = jnp.sum(dw, axis=2, keepdims=True)                      # (Nb, C, 1) lane reduce
    s2 = jnp.sum(dw * dw, axis=2, keepdims=True)
    g1 = jnp.sum(s1.reshape(Nb, groups, cpg, 1), axis=2)         # (Nb, G, 1)
    g2 = jnp.sum(s2.reshape(Nb, groups, cpg, 1), axis=2)
    mean_g = g1 * inv_n
    var_g = jnp.maximum(g2 * inv_n - mean_g * mean_g, 0.0)       # guard E[x^2]-E[x]^2
    inv_g = lax.rsqrt(var_g + eps)
    mean_c = jnp.broadcast_to(mean_g[:, :, None, :],
                              (Nb, groups, cpg, 1)).reshape(Nb, C, 1)
    inv_c = jnp.broadcast_to(inv_g[:, :, None, :],
                             (Nb, groups, cpg, 1)).reshape(Nb, C, 1)

    scale_c = inv_c * gnw_ref[...]                               # (Nb, C, 1)
    shift_c = gnb_ref[...] - mean_c * scale_c                    # (Nb, C, 1)
    normed = dw * scale_c + shift_c                              # (Nb, C, HW) full-slab

    # ---- 3) 1x1 conv fused on the VPU (C, O are tiny): O x C scalar FMAs over (Nb, HW) ----
    # TODO(synk): if C/O ever scale to >=64, switch this stage to one (O,C)@(C,Nb*HW) MXU matmul.
    chans = [normed[:, c, :] for c in range(C)]                  # C channel slabs (Nb, HW)
    ys = []
    for o in range(O):
        y_o = None
        for c in range(C):
            t = wpw_ref[o, c] * chans[c]                         # SMEM scalar * vector
            y_o = t if y_o is None else y_o + t
        ys.append(y_o + bpw_ref[o])
    y = jnp.stack(ys, axis=1)                                    # (Nb, O, HW)
    o_ref[...] = y.astype(o_ref.dtype)                           # one lane-dense store


def _vmem_capacity_bytes(default=64 << 20):
    """Per-core VMEM capacity; conservative (v7x-sized) fallback if the query fails."""
    try:
        info = pltpu.get_tpu_info()
        cap = getattr(info, "vmem_capacity_bytes", None)
        if cap:
            return int(cap)
    except Exception:
        pass
    return default


def _pick_batch_block(N, C, O, F, HW, *, in_itemsize, out_itemsize, vmem_budget):
    """Largest divisor of N whose working set (incl. in-kernel f32 intermediates) fits the
    budget, capped so the batch grid keeps >= 2 steps when N > 1 (both v7x TensorCores)."""
    cap = max(1, N // 2) if N > 1 else 1
    best = 1
    for nb in range(1, cap + 1):
        if N % nb:
            continue
        need = (2 * nb * C * F * in_itemsize        # double-buffered input blocks
                + 2 * nb * O * HW * out_itemsize    # double-buffered output blocks
                + 3 * nb * C * HW * 4               # f32 conv / normalized intermediates
                + nb * O * HW * 4)                  # f32 output accumulation
        if need <= vmem_budget:
            best = nb
    return best


def depthwise_conv2d_block(x, w_dw, b_dw, gn_w, gn_b, w_pw, b_pw,
                           *, kernel_size=3, padding=1, groups=4, eps=1e-5):
    """x: (N, C, H, W) -> (N, O, H, W).  stride=1, dilation=1 (module defaults)."""
    N, C, H, W = x.shape
    O = w_pw.shape[0]
    K = kernel_size
    assert C % groups == 0
    assert 2 * padding == K - 1, "wrapper assumes 'same' output (stride=1, dilation=1)"

    HW = H * W
    Hp = H + 2 * padding
    F = Hp * W + 2 * padding

    # Layout glue: pad in H only (W halo handled by 2 in-kernel column masks), flatten the
    # spatial dims so the lane axis is H*W, and add `padding` flat elements on each side so
    # every tap window is an in-bounds static lane slice.
    xh = jnp.pad(x, ((0, 0), (0, 0), (padding, padding), (0, 0)))
    xflat = jnp.pad(xh.reshape(N, C, Hp * W), ((0, 0), (0, 0), (padding, padding)))

    # Small parameters, pre-shaped so every in-kernel broadcast is the standard pattern.
    wdw = w_dw.reshape(C, K * K).T.reshape(K * K, C, 1).astype(jnp.float32)
    bdw = b_dw.reshape(C, 1).astype(jnp.float32)
    gnw = gn_w.reshape(C, 1).astype(jnp.float32)
    gnb = gn_b.reshape(C, 1).astype(jnp.float32)
    wpw = w_pw.reshape(O, C).astype(jnp.float32)     # SMEM scalars for the fused 1x1
    bpw = b_pw.reshape(O).astype(jnp.float32)

    # Generation-aware VMEM budgeting: ~cap/4 working-set budget, ~cap/2 scoped limit
    # (v5e/v6e: 32 / 64 MiB; v7x or unknown: 16 / 32 MiB).
    vmem_cap = _vmem_capacity_bytes()
    vmem_budget = min(vmem_cap // 4, 32 << 20)
    vmem_limit = int(min(vmem_cap // 2, 64 << 20))

    Nb = _pick_batch_block(N, C, O, F, HW,
                           in_itemsize=x.dtype.itemsize,
                           out_itemsize=x.dtype.itemsize,
                           vmem_budget=vmem_budget)

    kern = functools.partial(_dw_gn_pw_kernel, Nb=Nb, C=C, O=O, H=H, W=W, K=K,
                             pad=padding, groups=groups, eps=eps)

    out_flat = pl.pallas_call(
        kern,
        out_shape=jax.ShapeDtypeStruct((N, O, HW), x.dtype),
        grid=(N // Nb,),
        in_specs=[
            pl.BlockSpec((Nb, C, F), lambda i: (i, 0, 0)),           # padded flat input
            pl.BlockSpec((K * K, C, 1), lambda i: (0, 0, 0)),        # depthwise taps
            pl.BlockSpec((C, 1), lambda i: (0, 0)),                  # depthwise bias
            pl.BlockSpec((C, 1), lambda i: (0, 0)),                  # GN gamma
            pl.BlockSpec((C, 1), lambda i: (0, 0)),                  # GN beta
            pl.BlockSpec(memory_space=pltpu.MemorySpace.SMEM),       # 1x1 weight scalars
            pl.BlockSpec(memory_space=pltpu.MemorySpace.SMEM),       # 1x1 bias scalars
        ],
        out_specs=pl.BlockSpec((Nb, O, HW), lambda i: (i, 0, 0)),    # lane-dense output
        compiler_params=pltpu.CompilerParams(
            dimension_semantics=("parallel",),
            vmem_limit_bytes=vmem_limit),
    )(xflat, wdw, bdw, gnw, gnb, wpw, bpw)

    # wrapper-side reshape back to NCHW (contiguous -> free)
    return out_flat.reshape(N, O, H, W)


def _reference_forward(x, w_dw, b_dw, gn_w, gn_b, w_pw, b_pw, *, groups=4, eps=1e-5):
    """Pure-JAX reference matching the PyTorch module semantics."""
    N, C, H, W = x.shape
    y = lax.conv_general_dilated(
        x, w_dw.reshape(C, 1, 3, 3), window_strides=(1, 1),
        padding=((1, 1), (1, 1)), feature_group_count=C,
        dimension_numbers=("NCHW", "OIHW", "NCHW"))
    y = y + b_dw[None, :, None, None]
    yg = y.reshape(N, groups, -1)
    mean = yg.mean(axis=2, keepdims=True)
    var = ((yg - mean) ** 2).mean(axis=2, keepdims=True)
    yn = ((yg - mean) / jnp.sqrt(var + eps)).reshape(N, C, H, W)
    yn = yn * gn_w[None, :, None, None] + gn_b[None, :, None, None]
    out = jnp.einsum("oc,nchw->nohw", w_pw, yn) + b_pw[None, :, None, None]
    return out


if __name__ == "__main__":
    N, C_in, C_out, H, W = 2, 4, 8, 16, 16

    key = jax.random.PRNGKey(0)
    kx, k1, k2, k3, k4, k5, k6 = jax.random.split(key, 7)

    x = jax.random.normal(kx, (N, C_in, H, W), jnp.float32)
    # conv1: nn.Conv2d(C_in, C_in, 3, padding=1, groups=C_in) -> weight (C_in,1,3,3), bias (C_in,)
    w_dw = 0.2 * jax.random.normal(k1, (C_in, 3, 3), jnp.float32)
    b_dw = 0.1 * jax.random.normal(k2, (C_in,), jnp.float32)
    # norm_layer: nn.GroupNorm(4, C_in) -> weight (C_in,), bias (C_in,)
    gn_w = 1.0 + 0.1 * jax.random.normal(k3, (C_in,), jnp.float32)
    gn_b = 0.1 * jax.random.normal(k4, (C_in,), jnp.float32)
    # conv2: nn.Conv2d(C_in, C_out, 1) -> weight (C_out, C_in, 1, 1), bias (C_out,)
    w_pw = 0.3 * jax.random.normal(k5, (C_out, C_in), jnp.float32)
    b_pw = 0.1 * jax.random.normal(k6, (C_out,), jnp.float32)

    out = depthwise_conv2d_block(x, w_dw, b_dw, gn_w, gn_b, w_pw, b_pw)
    out = jax.block_until_ready(out)

    ref = _reference_forward(x, w_dw, b_dw, gn_w, gn_b, w_pw, b_pw)
    assert out.shape == (N, C_out, H, W)
    assert jnp.allclose(out, ref, atol=2e-4, rtol=2e-4), \
        f"max abs err = {float(jnp.max(jnp.abs(out - ref)))}"

    print("KERNEL_OK")
</pallas_src>

<mosaic_0001>
module attributes {stable_mosaic.version = 11 : i64} {
  func.func @_dw_gn_pw_kernel(%arg0: i32, %arg1: memref<1x4x290xf32, #tpu.memory_space<vmem>>, %arg2: memref<9x4x1xf32, #tpu.memory_space<vmem>>, %arg3: memref<4x1xf32, #tpu.memory_space<vmem>>, %arg4: memref<4x1xf32, #tpu.memory_space<vmem>>, %arg5: memref<4x1xf32, #tpu.memory_space<vmem>>, %arg6: memref<8x4xf32, #tpu.memory_space<smem>>, %arg7: memref<8xf32, #tpu.memory_space<smem>>, %arg8: memref<1x8x256xf32, #tpu.memory_space<vmem>>) attributes {dimension_semantics = [#tpu.dimension_semantics<parallel>], iteration_bounds = array<i64: 2>, scalar_prefetch = 0 : i64, scratch_operands = 0 : i64, tpu.core_type = #tpu.core_type<tc>, window_params = [{transform_indices = @transform_0, window_bounds = array<i64: 1, 4, 290>}, {pipeline_mode = #tpu.pipeline_mode<synchronous>, transform_indices = @transform_1, window_bounds = array<i64: 9, 4, 1>}, {pipeline_mode = #tpu.pipeline_mode<synchronous>, transform_indices = @transform_2, window_bounds = array<i64: 4, 1>}, {pipeline_mode = #tpu.pipeline_mode<synchronous>, transform_indices = @transform_3, window_bounds = array<i64: 4, 1>}, {pipeline_mode = #tpu.pipeline_mode<synchronous>, transform_indices = @transform_4, window_bounds = array<i64: 4, 1>}, {transform_indices = @transform_5, window_bounds = array<i64: 8, 4>}, {transform_indices = @transform_6, window_bounds = array<i64: 8>}, {transform_indices = @transform_7, window_bounds = array<i64: 1, 8, 256>}]} {
    %0 = tpu.iota {dimensions = array<i32: 2>} : vector<1x1x256xi32>
    %c16_i32 = arith.constant 16 : i32
    %c0_i32 = arith.constant 0 : i32
    %1 = arith.cmpi eq, %c16_i32, %c0_i32 : i32
    %c1_i32 = arith.constant 1 : i32
    %2 = arith.select %1, %c1_i32, %c16_i32 : i32
    %3 = vector.broadcast %2 : i32 to vector<1x1x256xi32>
    %4 = arith.remsi %0, %3 : vector<1x1x256xi32>
    %c0_i32_0 = arith.constant 0 : i32
    %5 = vector.broadcast %c0_i32_0 : i32 to vector<1x1x256xi32>
    %6 = arith.cmpi ne, %4, %5 : vector<1x1x256xi32>
    %c0_i32_1 = arith.constant 0 : i32
    %7 = vector.broadcast %c0_i32_1 : i32 to vector<1x1x256xi32>
    %8 = arith.cmpi slt, %4, %7 : vector<1x1x256xi32>
    %c0_i32_2 = arith.constant 0 : i32
    %9 = arith.cmpi slt, %2, %c0_i32_2 : i32
    %10 = vector.broadcast %9 : i1 to vector<1x1x256xi1>
    %11 = vector.broadcast %10 : vector<1x1x256xi1> to vector<1x1x256xi1>
    %12 = arith.xori %8, %11 : vector<1x1x256xi1>
    %13 = arith.andi %12, %6 : vector<1x1x256xi1>
    %14 = vector.broadcast %2 : i32 to vector<1x1x256xi32>
    %15 = arith.addi %4, %14 : vector<1x1x256xi32>
    %16 = arith.select %13, %15, %4 : vector<1x1x256xi1>, vector<1x1x256xi32>
    %c0 = arith.constant 0 : index
    %c0_3 = arith.constant 0 : index
    %c1 = arith.constant 1 : index
    %17 = vector.load %arg1[%c0, %c0_3, %c1] : memref<1x4x290xf32, #tpu.memory_space<vmem>>, vector<1x4x256xf32>
    %c1_4 = arith.constant 1 : index
    %c0_5 = arith.constant 0 : index
    %c0_6 = arith.constant 0 : index
    %18 = vector.load %arg2[%c1_4, %c0_5, %c0_6] : memref<9x4x1xf32, #tpu.memory_space<vmem>>, vector<1x4x1xf32>
    %19 = vector.shape_cast %18 : vector<1x4x1xf32> to vector<4x1xf32>
    %20 = vector.shape_cast %19 : vector<4x1xf32> to vector<1x4x1xf32>
    %21 = vector.broadcast %20 : vector<1x4x1xf32> to vector<1x4x256xf32>
    %22 = arith.mulf %17, %21 : vector<1x4x256xf32>
    %c0_7 = arith.constant 0 : index
    %c0_8 = arith.constant 0 : index
    %c17 = arith.constant 17 : index
    %23 = vector.load %arg1[%c0_7, %c0_8, %c17] : memref<1x4x290xf32, #tpu.memory_space<vmem>>, vector<1x4x256xf32>
    %c4 = arith.constant 4 : index
    %c0_9 = arith.constant 0 : index
    %c0_10 = arith.constant 0 : index
    %24 = vector.load %arg2[%c4, %c0_9, %c0_10] : memref<9x4x1xf32, #tpu.memory_space<vmem>>, vector<1x4x1xf32>
    %25 = vector.shape_cast %24 : vector<1x4x1xf32> to vector<4x1xf32>
    %26 = vector.shape_cast %25 : vector<4x1xf32> to vector<1x4x1xf32>
    %27 = vector.broadcast %26 : vector<1x4x1xf32> to vector<1x4x256xf32>
    %28 = arith.mulf %23, %27 : vector<1x4x256xf32>
    %29 = arith.addf %22, %28 : vector<1x4x256xf32>
    %c0_11 = arith.constant 0 : index
    %c0_12 = arith.constant 0 : index
    %c33 = arith.constant 33 : index
    %30 = vector.load %arg1[%c0_11, %c0_12, %c33] : memref<1x4x290xf32, #tpu.memory_space<vmem>>, vector<1x4x256xf32>
    %c7 = arith.constant 7 : index
    %c0_13 = arith.constant 0 : index
    %c0_14 = arith.constant 0 : index
    %31 = vector.load %arg2[%c7, %c0_13, %c0_14] : memref<9x4x1xf32, #tpu.memory_space<vmem>>, vector<1x4x1xf32>
    %32 = vector.shape_cast %31 : vector<1x4x1xf32> to vector<4x1xf32>
    %33 = vector.shape_cast %32 : vector<4x1xf32> to vector<1x4x1xf32>
    %34 = vector.broadcast %33 : vector<1x4x1xf32> to vector<1x4x256xf32>
    %35 = arith.mulf %30, %34 : vector<1x4x256xf32>
    %36 = arith.addf %29, %35 : vector<1x4x256xf32>
    %c-1_i32 = arith.constant -1 : i32
    %37 = vector.broadcast %c-1_i32 : i32 to vector<1x1x256xi32>
    %38 = arith.addi %16, %37 : vector<1x1x256xi32>
    %c0_i32_15 = arith.constant 0 : i32
    %39 = vector.broadcast %c0_i32_15 : i32 to vector<1x1x256xi32>
    %40 = arith.cmpi sge, %38, %39 : vector<1x1x256xi32>
    %c-1_i32_16 = arith.constant -1 : i32
    %41 = vector.broadcast %c-1_i32_16 : i32 to vector<1x1x256xi32>
    %42 = arith.addi %16, %41 : vector<1x1x256xi32>
    %c16_i32_17 = arith.constant 16 : i32
    %43 = vector.broadcast %c16_i32_17 : i32 to vector<1x1x256xi32>
    %44 = arith.cmpi slt, %42, %43 : vector<1x1x256xi32>
    %45 = arith.andi %40, %44 : vector<1x1x256xi1>
    %c0_18 = arith.constant 0 : index
    %c0_19 = arith.constant 0 : index
    %c0_20 = arith.constant 0 : index
    %46 = vector.load %arg1[%c0_18, %c0_19, %c0_20] : memref<1x4x290xf32, #tpu.memory_space<vmem>>, vector<1x4x256xf32>
    %c0_21 = arith.constant 0 : index
    %c0_22 = arith.constant 0 : index
    %c0_23 = arith.constant 0 : index
    %47 = vector.load %arg2[%c0_21, %c0_22, %c0_23] : memref<9x4x1xf32, #tpu.memory_space<vmem>>, vector<1x4x1xf32>
    %48 = vector.shape_cast %47 : vector<1x4x1xf32> to vector<4x1xf32>
    %49 = vector.shape_cast %48 : vector<4x1xf32> to vector<1x4x1xf32>
    %50 = vector.broadcast %49 : vector<1x4x1xf32> to vector<1x4x256xf32>
    %51 = arith.mulf %46, %50 : vector<1x4x256xf32>
    %c0_24 = arith.constant 0 : index
    %c0_25 = arith.constant 0 : index
    %c16 = arith.constant 16 : index
    %52 = vector.load %arg1[%c0_24, %c0_25, %c16] : memref<1x4x290xf32, #tpu.memory_space<vmem>>, vector<1x4x256xf32>
    %c3 = arith.constant 3 : index
    %c0_26 = arith.constant 0 : index
    %c0_27 = arith.constant 0 : index
    %53 = vector.load %arg2[%c3, %c0_26, %c0_27] : memref<9x4x1xf32, #tpu.memory_space<vmem>>, vector<1x4x1xf32>
    %54 = vector.shape_cast %53 : vector<1x4x1xf32> to vector<4x1xf32>
    %55 = vector.shape_cast %54 : vector<4x1xf32> to vector<1x4x1xf32>
    %56 = vector.broadcast %55 : vector<1x4x1xf32> to vector<1x4x256xf32>
    %57 = arith.mulf %52, %56 : vector<1x4x256xf32>
    %58 = arith.addf %51, %57 : vector<1x4x256xf32>
    %c0_28 = arith.constant 0 : index
    %c0_29 = arith.constant 0 : index
    %c32 = arith.constant 32 : index
    %59 = vector.load %arg1[%c0_28, %c0_29, %c32] : memref<1x4x290xf32, #tpu.memory_space<vmem>>, vector<1x4x256xf32>
    %c6 = arith.constant 6 : index
    %c0_30 = arith.constant 0 : index
    %c0_31 = arith.constant 0 : index
    %60 = vector.load %arg2[%c6, %c0_30, %c0_31] : memref<9x4x1xf32, #tpu.memory_space<vmem>>, vector<1x4x1xf32>
    %61 = vector.shape_cast %60 : vector<1x4x1xf32> to vector<4x1xf32>
    %62 = vector.shape_cast %61 : vector<4x1xf32> to vector<1x4x1xf32>
    %63 = vector.broadcast %62 : vector<1x4x1xf32> to vector<1x4x256xf32>
    %64 = arith.mulf %59, %63 : vector<1x4x256xf32>
    %65 = arith.addf %58, %64 : vector<1x4x256xf32>
    %cst = arith.constant 0.000000e+00 : f32
    %66 = vector.shape_cast %45 : vector<1x1x256xi1> to vector<1x1x256xi1>
    %67 = vector.broadcast %66 : vector<1x1x256xi1> to vector<1x4x256xi1>
    %68 = vector.broadcast %cst : f32 to vector<1x4x256xf32>
    %69 = arith.select %67, %65, %68 : vector<1x4x256xi1>, vector<1x4x256xf32>
    %70 = arith.addf %36, %69 : vector<1x4x256xf32>
    %c1_i32_32 = arith.constant 1 : i32
    %71 = vector.broadcast %c1_i32_32 : i32 to vector<1x1x256xi32>
    %72 = arith.addi %16, %71 : vector<1x1x256xi32>
    %c0_i32_33 = arith.constant 0 : i32
    %73 = vector.broadcast %c0_i32_33 : i32 to vector<1x1x256xi32>
    %74 = arith.cmpi sge, %72, %73 : vector<1x1x256xi32>
    %c1_i32_34 = arith.constant 1 : i32
    %75 = vector.broadcast %c1_i32_34 : i32 to vector<1x1x256xi32>
    %76 = arith.addi %16, %75 : vector<1x1x256xi32>
    %c16_i32_35 = arith.constant 16 : i32
    %77 = vector.broadcast %c16_i32_35 : i32 to vector<1x1x256xi32>
    %78 = arith.cmpi slt, %76, %77 : vector<1x1x256xi32>
    %79 = arith.andi %74, %78 : vector<1x1x256xi1>
    %c0_36 = arith.constant 0 : index
    %c0_37 = arith.constant 0 : index
    %c2 = arith.constant 2 : index
    %80 = vector.load %arg1[%c0_36, %c0_37, %c2] : memref<1x4x290xf32, #tpu.memory_space<vmem>>, vector<1x4x256xf32>
    %c2_38 = arith.constant 2 : index
    %c0_39 = arith.constant 0 : index
    %c0_40 = arith.constant 0 : index
    %81 = vector.load %arg2[%c2_38, %c0_39, %c0_40] : memref<9x4x1xf32, #tpu.memory_space<vmem>>, vector<1x4x1xf32>
    %82 = vector.shape_cast %81 : vector<1x4x1xf32> to vector<4x1xf32>
    %83 = vector.shape_cast %82 : vector<4x1xf32> to vector<1x4x1xf32>
    %84 = vector.broadcast %83 : vector<1x4x1xf32> to vector<1x4x256xf32>
    %85 = arith.mulf %80, %84 : vector<1x4x256xf32>
    %c0_41 = arith.constant 0 : index
    %c0_42 = arith.constant 0 : index
    %c18 = arith.constant 18 : index
    %86 = vector.load %arg1[%c0_41, %c0_42, %c18] : memref<1x4x290xf32, #tpu.memory_space<vmem>>, vector<1x4x256xf32>
    %c5 = arith.constant 5 : index
    %c0_43 = arith.constant 0 : index
    %c0_44 = arith.constant 0 : index
    %87 = vector.load %arg2[%c5, %c0_43, %c0_44] : memref<9x4x1xf32, #tpu.memory_space<vmem>>, vector<1x4x1xf32>
    %88 = vector.shape_cast %87 : vector<1x4x1xf32> to vector<4x1xf32>
    %89 = vector.shape_cast %88 : vector<4x1xf32> to vector<1x4x1xf32>
    %90 = vector.broadcast %89 : vector<1x4x1xf32> to vector<1x4x256xf32>
    %91 = arith.mulf %86, %90 : vector<1x4x256xf32>
    %92 = arith.addf %85, %91 : vector<1x4x256xf32>
    %c0_45 = arith.constant 0 : index
    %c0_46 = arith.constant 0 : index
    %c34 = arith.constant 34 : index
    %93 = vector.load %arg1[%c0_45, %c0_46, %c34] : memref<1x4x290xf32, #tpu.memory_space<vmem>>, vector<1x4x256xf32>
    %c8 = arith.constant 8 : index
    %c0_47 = arith.constant 0 : index
    %c0_48 = arith.constant 0 : index
    %94 = vector.load %arg2[%c8, %c0_47, %c0_48] : memref<9x4x1xf32, #tpu.memory_space<vmem>>, vector<1x4x1xf32>
    %95 = vector.shape_cast %94 : vector<1x4x1xf32> to vector<4x1xf32>
    %96 = vector.shape_cast %95 : vector<4x1xf32> to vector<1x4x1xf32>
    %97 = vector.broadcast %96 : vector<1x4x1xf32> to vector<1x4x256xf32>
    %98 = arith.mulf %93, %97 : vector<1x4x256xf32>
    %99 = arith.addf %92, %98 : vector<1x4x256xf32>
    %cst_49 = arith.constant 0.000000e+00 : f32
    %100 = vector.shape_cast %79 : vector<1x1x256xi1> to vector<1x1x256xi1>
    %101 = vector.broadcast %100 : vector<1x1x256xi1> to vector<1x4x256xi1>
    %102 = vector.broadcast %cst_49 : f32 to vector<1x4x256xf32>
    %103 = arith.select %101, %99, %102 : vector<1x4x256xi1>, vector<1x4x256xf32>
    %104 = arith.addf %70, %103 : vector<1x4x256xf32>
    %c0_50 = arith.constant 0 : index
    %c0_51 = arith.constant 0 : index
    %105 = vector.load %arg3[%c0_50, %c0_51] : memref<4x1xf32, #tpu.memory_space<vmem>>, vector<4x1xf32>
    %106 = vector.shape_cast %105 : vector<4x1xf32> to vector<1x4x1xf32>
    %107 = vector.broadcast %106 : vector<1x4x1xf32> to vector<1x4x256xf32>
    %108 = arith.addf %104, %107 : vector<1x4x256xf32>
    %cst_52 = arith.constant dense<0.000000e+00> : vector<1x4xf32>
    %109 = vector.multi_reduction <add>, %108, %cst_52 [2] : vector<1x4x256xf32> to vector<1x4xf32>
    %110 = vector.shape_cast %109 : vector<1x4xf32> to vector<1x4x1xf32>
    %111 = arith.mulf %108, %108 : vector<1x4x256xf32>
    %cst_53 = arith.constant dense<0.000000e+00> : vector<1x4xf32>
    %112 = vector.multi_reduction <add>, %111, %cst_53 [2] : vector<1x4x256xf32> to vector<1x4xf32>
    %113 = vector.shape_cast %112 : vector<1x4xf32> to vector<1x4x1xf32>
    %114 = vector.shape_cast %110 : vector<1x4x1xf32> to vector<1x4x1x1xf32>
    %cst_54 = arith.constant dense<0.000000e+00> : vector<1x4x1xf32>
    %115 = vector.multi_reduction <add>, %114, %cst_54 [2] : vector<1x4x1x1xf32> to vector<1x4x1xf32>
    %116 = vector.shape_cast %113 : vector<1x4x1xf32> to vector<1x4x1x1xf32>
    %cst_55 = arith.constant dense<0.000000e+00> : vector<1x4x1xf32>
    %117 = vector.multi_reduction <add>, %116, %cst_55 [2] : vector<1x4x1x1xf32> to vector<1x4x1xf32>
    %cst_56 = arith.constant 3.906250e-03 : f32
    %118 = vector.broadcast %cst_56 : f32 to vector<1x4x1xf32>
    %119 = arith.mulf %115, %118 : vector<1x4x1xf32>
    %cst_57 = arith.constant 3.906250e-03 : f32
    %120 = vector.broadcast %cst_57 : f32 to vector<1x4x1xf32>
    %121 = arith.mulf %117, %120 : vector<1x4x1xf32>
    %122 = arith.mulf %119, %119 : vector<1x4x1xf32>
    %123 = arith.subf %121, %122 : vector<1x4x1xf32>
    %cst_58 = arith.constant 0.000000e+00 : f32
    %124 = vector.broadcast %cst_58 : f32 to vector<1x4x1xf32>
    %125 = arith.maximumf %123, %124 : vector<1x4x1xf32>
    %cst_59 = arith.constant 9.99999974E-6 : f32
    %126 = vector.broadcast %cst_59 : f32 to vector<1x4x1xf32>
    %127 = arith.addf %125, %126 : vector<1x4x1xf32>
    %128 = math.rsqrt %127 : vector<1x4x1xf32>
    %129 = vector.shape_cast %119 : vector<1x4x1xf32> to vector<1x4x1x1xf32>
    %130 = vector.shape_cast %129 : vector<1x4x1x1xf32> to vector<1x4x1xf32>
    %131 = vector.shape_cast %128 : vector<1x4x1xf32> to vector<1x4x1x1xf32>
    %132 = vector.shape_cast %131 : vector<1x4x1x1xf32> to vector<1x4x1xf32>
    %c0_60 = arith.constant 0 : index
    %c0_61 = arith.constant 0 : index
    %133 = vector.load %arg4[%c0_60, %c0_61] : memref<4x1xf32, #tpu.memory_space<vmem>>, vector<4x1xf32>
    %134 = vector.shape_cast %133 : vector<4x1xf32> to vector<1x4x1xf32>
    %135 = arith.mulf %132, %134 : vector<1x4x1xf32>
    %c0_62 = arith.constant 0 : index
    %c0_63 = arith.constant 0 : index
    %136 = vector.load %arg5[%c0_62, %c0_63] : memref<4x1xf32, #tpu.memory_space<vmem>>, vector<4x1xf32>
    %137 = arith.mulf %130, %135 : vector<1x4x1xf32>
    %138 = vector.shape_cast %136 : vector<4x1xf32> to vector<1x4x1xf32>
    %139 = arith.subf %138, %137 : vector<1x4x1xf32>
    %140 = vector.broadcast %135 : vector<1x4x1xf32> to vector<1x4x256xf32>
    %141 = arith.mulf %108, %140 : vector<1x4x256xf32>
    %142 = vector.broadcast %139 : vector<1x4x1xf32> to vector<1x4x256xf32>
    %143 = arith.addf %141, %142 : vector<1x4x256xf32>
    %144 = vector.extract_strided_slice %143 {offsets = [0, 0, 0], sizes = [1, 1, 256], strides = [1, 1, 1]} : vector<1x4x256xf32> to vector<1x1x256xf32>
    %145 = vector.shape_cast %144 : vector<1x1x256xf32> to vector<1x256xf32>
    %146 = vector.extract_strided_slice %143 {offsets = [0, 1, 0], sizes = [1, 1, 256], strides = [1, 1, 1]} : vector<1x4x256xf32> to vector<1x1x256xf32>
    %147 = vector.shape_cast %146 : vector<1x1x256xf32> to vector<1x256xf32>
    %148 = vector.extract_strided_slice %143 {offsets = [0, 2, 0], sizes = [1, 1, 256], strides = [1, 1, 1]} : vector<1x4x256xf32> to vector<1x1x256xf32>
    %149 = vector.shape_cast %148 : vector<1x1x256xf32> to vector<1x256xf32>
    %150 = vector.extract_strided_slice %143 {offsets = [0, 3, 0], sizes = [1, 1, 256], strides = [1, 1, 1]} : vector<1x4x256xf32> to vector<1x1x256xf32>
    %151 = vector.shape_cast %150 : vector<1x1x256xf32> to vector<1x256xf32>
    %c0_64 = arith.constant 0 : index
    %c0_65 = arith.constant 0 : index
    %152 = memref.load %arg6[%c0_64, %c0_65] : memref<8x4xf32, #tpu.memory_space<smem>>
    %153 = vector.broadcast %152 : f32 to vector<1x256xf32>
    %154 = arith.mulf %153, %145 : vector<1x256xf32>
    %c0_66 = arith.constant 0 : index
    %c1_67 = arith.constant 1 : index
    %155 = memref.load %arg6[%c0_66, %c1_67] : memref<8x4xf32, #tpu.memory_space<smem>>
    %156 = vector.broadcast %155 : f32 to vector<1x256xf32>
    %157 = arith.mulf %156, %147 : vector<1x256xf32>
    %158 = arith.addf %154, %157 : vector<1x256xf32>
    %c0_68 = arith.constant 0 : index
    %c2_69 = arith.constant 2 : index
    %159 = memref.load %arg6[%c0_68, %c2_69] : memref<8x4xf32, #tpu.memory_space<smem>>
    %160 = vector.broadcast %159 : f32 to vector<1x256xf32>
    %161 = arith.mulf %160, %149 : vector<1x256xf32>
    %162 = arith.addf %158, %161 : vector<1x256xf32>
    %c0_70 = arith.constant 0 : index
    %c3_71 = arith.constant 3 : index
    %163 = memref.load %arg6[%c0_70, %c3_71] : memref<8x4xf32, #tpu.memory_space<smem>>
    %164 = vector.broadcast %163 : f32 to vector<1x256xf32>
    %165 = arith.mulf %164, %151 : vector<1x256xf32>
    %166 = arith.addf %162, %165 : vector<1x256xf32>
    %c0_72 = arith.constant 0 : index
    %167 = memref.load %arg7[%c0_72] : memref<8xf32, #tpu.memory_space<smem>>
    %168 = vector.broadcast %167 : f32 to vector<1x256xf32>
    %169 = arith.addf %166, %168 : vector<1x256xf32>
    %c1_73 = arith.constant 1 : index
    %c0_74 = arith.constant 0 : index
    %170 = memref.load %arg6[%c1_73, %c0_74] : memref<8x4xf32, #tpu.memory_space<smem>>
    %171 = vector.broadcast %170 : f32 to vector<1x256xf32>
    %172 = arith.mulf %171, %145 : vector<1x256xf32>
    %c1_75 = arith.constant 1 : index
    %c1_76 = arith.constant 1 : index
    %173 = memref.load %arg6[%c1_75, %c1_76] : memref<8x4xf32, #tpu.memory_space<smem>>
    %174 = vector.broadcast %173 : f32 to vector<1x256xf32>
    %175 = arith.mulf %174, %147 : vector<1x256xf32>
    %176 = arith.addf %172, %175 : vector<1x256xf32>
    %c1_77 = arith.constant 1 : index
    %c2_78 = arith.constant 2 : index
    %177 = memref.load %arg6[%c1_77, %c2_78] : memref<8x4xf32, #tpu.memory_space<smem>>
    %178 = vector.broadcast %177 : f32 to vector<1x256xf32>
    %179 = arith.mulf %178, %149 : vector<1x256xf32>
    %180 = arith.addf %176, %179 : vector<1x256xf32>
    %c1_79 = arith.constant 1 : index
    %c3_80 = arith.constant 3 : index
    %181 = memref.load %arg6[%c1_79, %c3_80] : memref<8x4xf32, #tpu.memory_space<smem>>
    %182 = vector.broadcast %181 : f32 to vector<1x256xf32>
    %183 = arith.mulf %182, %151 : vector<1x256xf32>
    %184 = arith.addf %180, %183 : vector<1x256xf32>
    %c1_81 = arith.constant 1 : index
    %185 = memref.load %arg7[%c1_81] : memref<8xf32, #tpu.memory_space<smem>>
    %186 = vector.broadcast %185 : f32 to vector<1x256xf32>
    %187 = arith.addf %184, %186 : vector<1x256xf32>
    %c2_82 = arith.constant 2 : index
    %c0_83 = arith.constant 0 : index
    %188 = memref.load %arg6[%c2_82, %c0_83] : memref<8x4xf32, #tpu.memory_space<smem>>
    %189 = vector.broadcast %188 : f32 to vector<1x256xf32>
    %190 = arith.mulf %189, %145 : vector<1x256xf32>
    %c2_84 = arith.constant 2 : index
    %c1_85 = arith.constant 1 : index
    %191 = memref.load %arg6[%c2_84, %c1_85] : memref<8x4xf32, #tpu.memory_space<smem>>
    %192 = vector.broadcast %191 : f32 to vector<1x256xf32>
    %193 = arith.mulf %192, %147 : vector<1x256xf32>
    %194 = arith.addf %190, %193 : vector<1x256xf32>
    %c2_86 = arith.constant 2 : index
    %c2_87 = arith.constant 2 : index
    %195 = memref.load %arg6[%c2_86, %c2_87] : memref<8x4xf32, #tpu.memory_space<smem>>
    %196 = vector.broadcast %195 : f32 to vector<1x256xf32>
    %197 = arith.mulf %196, %149 : vector<1x256xf32>
    %198 = arith.addf %194, %197 : vector<1x256xf32>
    %c2_88 = arith.constant 2 : index
    %c3_89 = arith.constant 3 : index
    %199 = memref.load %arg6[%c2_88, %c3_89] : memref<8x4xf32, #tpu.memory_space<smem>>
    %200 = vector.broadcast %199 : f32 to vector<1x256xf32>
    %201 = arith.mulf %200, %151 : vector<1x256xf32>
    %202 = arith.addf %198, %201 : vector<1x256xf32>
    %c2_90 = arith.constant 2 : index
    %203 = memref.load %arg7[%c2_90] : memref<8xf32, #tpu.memory_space<smem>>
    %204 = vector.broadcast %203 : f32 to vector<1x256xf32>
    %205 = arith.addf %202, %204 : vector<1x256xf32>
    %c3_91 = arith.constant 3 : index
    %c0_92 = arith.constant 0 : index
    %206 = memref.load %arg6[%c3_91, %c0_92] : memref<8x4xf32, #tpu.memory_space<smem>>
    %207 = vector.broadcast %206 : f32 to vector<1x256xf32>
    %208 = arith.mulf %207, %145 : vector<1x256xf32>
    %c3_93 = arith.constant 3 : index
    %c1_94 = arith.constant 1 : index
    %209 = memref.load %arg6[%c3_93, %c1_94] : memref<8x4xf32, #tpu.memory_space<smem>>
    %210 = vector.broadcast %209 : f32 to vector<1x256xf32>
    %211 = arith.mulf %210, %147 : vector<1x256xf32>
    %212 = arith.addf %208, %211 : vector<1x256xf32>
    %c3_95 = arith.constant 3 : index
    %c2_96 = arith.constant 2 : index
    %213 = memref.load %arg6[%c3_95, %c2_96] : memref<8x4xf32, #tpu.memory_space<smem>>
    %214 = vector.broadcast %213 : f32 to vector<1x256xf32>
    %215 = arith.mulf %214, %149 : vector<1x256xf32>
    %216 = arith.addf %212, %215 : vector<1x256xf32>
    %c3_97 = arith.constant 3 : index
    %c3_98 = arith.constant 3 : index
    %217 = memref.load %arg6[%c3_97, %c3_98] : memref<8x4xf32, #tpu.memory_space<smem>>
    %218 = vector.broadcast %217 : f32 to vector<1x256xf32>
    %219 = arith.mulf %218, %151 : vector<1x256xf32>
    %220 = arith.addf %216, %219 : vector<1x256xf32>
    %c3_99 = arith.constant 3 : index
    %221 = memref.load %arg7[%c3_99] : memref<8xf32, #tpu.memory_space<smem>>
    %222 = vector.broadcast %221 : f32 to vector<1x256xf32>
    %223 = arith.addf %220, %222 : vector<1x256xf32>
    %c4_100 = arith.constant 4 : index
    %c0_101 = arith.constant 0 : index
    %224 = memref.load %arg6[%c4_100, %c0_101] : memref<8x4xf32, #tpu.memory_space<smem>>
    %225 = vector.broadcast %224 : f32 to vector<1x256xf32>
    %226 = arith.mulf %225, %145 : vector<1x256xf32>
    %c4_102 = arith.constant 4 : index
    %c1_103 = arith.constant 1 : index
    %227 = memref.load %arg6[%c4_102, %c1_103] : memref<8x4xf32, #tpu.memory_space<smem>>
    %228 = vector.broadcast %227 : f32 to vector<1x256xf32>
    %229 = arith.mulf %228, %147 : vector<1x256xf32>
    %230 = arith.addf %226, %229 : vector<1x256xf32>
    %c4_104 = arith.constant 4 : index
    %c2_105 = arith.constant 2 : index
    %231 = memref.load %arg6[%c4_104, %c2_105] : memref<8x4xf32, #tpu.memory_space<smem>>
    %232 = vector.broadcast %231 : f32 to vector<1x256xf32>
    %233 = arith.mulf %232, %149 : vector<1x256xf32>
    %234 = arith.addf %230, %233 : vector<1x256xf32>
    %c4_106 = arith.constant 4 : index
    %c3_107 = arith.constant 3 : index
    %235 = memref.load %arg6[%c4_106, %c3_107] : memref<8x4xf32, #tpu.memory_space<smem>>
    %236 = vector.broadcast %235 : f32 to vector<1x256xf32>
    %237 = arith.mulf %236, %151 : vector<1x256xf32>
    %238 = arith.addf %234, %237 : vector<1x256xf32>
    %c4_108 = arith.constant 4 : index
    %239 = memref.load %arg7[%c4_108] : memref<8xf32, #tpu.memory_space<smem>>
    %240 = vector.broadcast %239 : f32 to vector<1x256xf32>
    %241 = arith.addf %238, %240 : vector<1x256xf32>
    %c5_109 = arith.constant 5 : index
    %c0_110 = arith.constant 0 : index
    %242 = memref.load %arg6[%c5_109, %c0_110] : memref<8x4xf32, #tpu.memory_space<smem>>
    %243 = vector.broadcast %242 : f32 to vector<1x256xf32>
    %244 = arith.mulf %243, %145 : vector<1x256xf32>
    %c5_111 = arith.constant 5 : index
    %c1_112 = arith.constant 1 : index
    %245 = memref.load %arg6[%c5_111, %c1_112] : memref<8x4xf32, #tpu.memory_space<smem>>
    %246 = vector.broadcast %245 : f32 to vector<1x256xf32>
    %247 = arith.mulf %246, %147 : vector<1x256xf32>
    %248 = arith.addf %244, %247 : vector<1x256xf32>
    %c5_113 = arith.constant 5 : index
    %c2_114 = arith.constant 2 : index
    %249 = memref.load %arg6[%c5_113, %c2_114] : memref<8x4xf32, #tpu.memory_space<smem>>
    %250 = vector.broadcast %249 : f32 to vector<1x256xf32>
    %251 = arith.mulf %250, %149 : vector<1x256xf32>
    %252 = arith.addf %248, %251 : vector<1x256xf32>
    %c5_115 = arith.constant 5 : index
    %c3_116 = arith.constant 3 : index
    %253 = memref.load %arg6[%c5_115, %c3_116] : memref<8x4xf32, #tpu.memory_space<smem>>
    %254 = vector.broadcast %253 : f32 to vector<1x256xf32>
    %255 = arith.mulf %254, %151 : vector<1x256xf32>
    %256 = arith.addf %252, %255 : vector<1x256xf32>
    %c5_117 = arith.constant 5 : index
    %257 = memref.load %arg7[%c5_117] : memref<8xf32, #tpu.memory_space<smem>>
    %258 = vector.broadcast %257 : f32 to vector<1x256xf32>
    %259 = arith.addf %256, %258 : vector<1x256xf32>
    %c6_118 = arith.constant 6 : index
    %c0_119 = arith.constant 0 : index
    %260 = memref.load %arg6[%c6_118, %c0_119] : memref<8x4xf32, #tpu.memory_space<smem>>
    %261 = vector.broadcast %260 : f32 to vector<1x256xf32>
    %262 = arith.mulf %261, %145 : vector<1x256xf32>
    %c6_120 = arith.constant 6 : index
    %c1_121 = arith.constant 1 : index
    %263 = memref.load %arg6[%c6_120, %c1_121] : memref<8x4xf32, #tpu.memory_space<smem>>
    %264 = vector.broadcast %263 : f32 to vector<1x256xf32>
    %265 = arith.mulf %264, %147 : vector<1x256xf32>
    %266 = arith.addf %262, %265 : vector<1x256xf32>
    %c6_122 = arith.constant 6 : index
    %c2_123 = arith.constant 2 : index
    %267 = memref.load %arg6[%c6_122, %c2_123] : memref<8x4xf32, #tpu.memory_space<smem>>
    %268 = vector.broadcast %267 : f32 to vector<1x256xf32>
    %269 = arith.mulf %268, %149 : vector<1x256xf32>
    %270 = arith.addf %266, %269 : vector<1x256xf32>
    %c6_124 = arith.constant 6 : index
    %c3_125 = arith.constant 3 : index
    %271 = memref.load %arg6[%c6_124, %c3_125] : memref<8x4xf32, #tpu.memory_space<smem>>
    %272 = vector.broadcast %271 : f32 to vector<1x256xf32>
    %273 = arith.mulf %272, %151 : vector<1x256xf32>
    %274 = arith.addf %270, %273 : vector<1x256xf32>
    %c6_126 = arith.constant 6 : index
    %275 = memref.load %arg7[%c6_126] : memref<8xf32, #tpu.memory_space<smem>>
    %276 = vector.broadcast %275 : f32 to vector<1x256xf32>
    %277 = arith.addf %274, %276 : vector<1x256xf32>
    %c7_127 = arith.constant 7 : index
    %c0_128 = arith.constant 0 : index
    %278 = memref.load %arg6[%c7_127, %c0_128] : memref<8x4xf32, #tpu.memory_space<smem>>
    %279 = vector.broadcast %278 : f32 to vector<1x256xf32>
    %280 = arith.mulf %279, %145 : vector<1x256xf32>
    %c7_129 = arith.constant 7 : index
    %c1_130 = arith.constant 1 : index
    %281 = memref.load %arg6[%c7_129, %c1_130] : memref<8x4xf32, #tpu.memory_space<smem>>
    %282 = vector.broadcast %281 : f32 to vector<1x256xf32>
    %283 = arith.mulf %282, %147 : vector<1x256xf32>
    %284 = arith.addf %280, %283 : vector<1x256xf32>
    %c7_131 = arith.constant 7 : index
    %c2_132 = arith.constant 2 : index
    %285 = memref.load %arg6[%c7_131, %c2_132] : memref<8x4xf32, #tpu.memory_space<smem>>
    %286 = vector.broadcast %285 : f32 to vector<1x256xf32>
    %287 = arith.mulf %286, %149 : vector<1x256xf32>
    %288 = arith.addf %284, %287 : vector<1x256xf32>
    %c7_133 = arith.constant 7 : index
    %c3_134 = arith.constant 3 : index
    %289 = memref.load %arg6[%c7_133, %c3_134] : memref<8x4xf32, #tpu.memory_space<smem>>
    %290 = vector.broadcast %289 : f32 to vector<1x256xf32>
    %291 = arith.mulf %290, %151 : vector<1x256xf32>
    %292 = arith.addf %288, %291 : vector<1x256xf32>
    %c7_135 = arith.constant 7 : index
    %293 = memref.load %arg7[%c7_135] : memref<8xf32, #tpu.memory_space<smem>>
    %294 = vector.broadcast %293 : f32 to vector<1x256xf32>
    %295 = arith.addf %292, %294 : vector<1x256xf32>
    %296 = vector.shape_cast %169 : vector<1x256xf32> to vector<1x1x256xf32>
    %297 = vector.shape_cast %187 : vector<1x256xf32> to vector<1x1x256xf32>
    %298 = vector.shape_cast %205 : vector<1x256xf32> to vector<1x1x256xf32>
    %299 = vector.shape_cast %223 : vector<1x256xf32> to vector<1x1x256xf32>
    %300 = vector.shape_cast %241 : vector<1x256xf32> to vector<1x1x256xf32>
    %301 = vector.shape_cast %259 : vector<1x256xf32> to vector<1x1x256xf32>
    %302 = vector.shape_cast %277 : vector<1x256xf32> to vector<1x1x256xf32>
    %303 = vector.shape_cast %295 : vector<1x256xf32> to vector<1x1x256xf32>
    %304 = tpu.concatenate %296, %297, %298, %299, %300, %301, %302, %303 in 1 : vector<1x1x256xf32>, vector<1x1x256xf32>, vector<1x1x256xf32>, vector<1x1x256xf32>, vector<1x1x256xf32>, vector<1x1x256xf32>, vector<1x1x256xf32>, vector<1x1x256xf32> -> vector<1x8x256xf32>
    %c0_136 = arith.constant 0 : index
    %c0_137 = arith.constant 0 : index
    %c0_138 = arith.constant 0 : index
    %305 = vector.load %arg8[%c0_136, %c0_137, %c0_138] : memref<1x8x256xf32, #tpu.memory_space<vmem>>, vector<1x8x256xf32>
    tpu.vector_store %arg8[%c0_136, %c0_137, %c0_138], %304 {strides = array<i32>} : memref<1x8x256xf32, #tpu.memory_space<vmem>>, vector<1x8x256xf32>,
    return
  }
  func.func @transform_0(%arg0: i32) -> (i32, i32, i32) {
    %c0_i32 = arith.constant 0 : i32
    %c0_i32_0 = arith.constant 0 : i32
    %c0_i32_1 = arith.constant 0 : i32
    return %arg0, %c0_i32, %c0_i32_0 : i32, i32, i32
  }
  func.func @transform_1(%arg0: i32) -> (i32, i32, i32) {
    %c0_i32 = arith.constant 0 : i32
    %c0_i32_0 = arith.constant 0 : i32
    %c0_i32_1 = arith.constant 0 : i32
    %c0_i32_2 = arith.constant 0 : i32
    return %c0_i32, %c0_i32_0, %c0_i32_1 : i32, i32, i32
  }
  func.func @transform_2(%arg0: i32) -> (i32, i32) {
    %c0_i32 = arith.constant 0 : i32
    %c0_i32_0 = arith.constant 0 : i32
    %c0_i32_1 = arith.constant 0 : i32
    return %c0_i32, %c0_i32_0 : i32, i32
  }
  func.func @transform_3(%arg0: i32) -> (i32, i32) {
    %c0_i32 = arith.constant 0 : i32
    %c0_i32_0 = arith.constant 0 : i32
    %c0_i32_1 = arith.constant 0 : i32
    return %c0_i32, %c0_i32_0 : i32, i32
  }
  func.func @transform_4(%arg0: i32) -> (i32, i32) {
    %c0_i32 = arith.constant 0 : i32
    %c0_i32_0 = arith.constant 0 : i32
    %c0_i32_1 = arith.constant 0 : i32
    return %c0_i32, %c0_i32_0 : i32, i32
  }
  func.func @transform_5(%arg0: i32) -> (i32, i32) {
    %c0_i32 = arith.constant 0 : i32
    %c0_i32_0 = arith.constant 0 : i32
    %c0_i32_1 = arith.constant 0 : i32
    return %c0_i32, %c0_i32_0 : i32, i32
  }
  func.func @transform_6(%arg0: i32) -> i32 {
    %c0_i32 = arith.constant 0 : i32
    %c0_i32_0 = arith.constant 0 : i32
    return %c0_i32 : i32
  }
  func.func @transform_7(%arg0: i32) -> (i32, i32, i32) {
    %c0_i32 = arith.constant 0 : i32
    %c0_i32_0 = arith.constant 0 : i32
    %c0_i32_1 = arith.constant 0 : i32
    return %arg0, %c0_i32, %c0_i32_0 : i32, i32, i32
  }
}

</mosaic_0001>

<llo_original>
// kernel: tpu_custom_call.1
$region0: #{tpu_custom_call.1}
  #allocation0 [shape = 'u32[]', space=smem, size = 0x4, offset = 0x4, fixed_abs, tag = 'smem constant byte address 0x4 - core index']
  #allocation1 [shape = 'u32[144,128]{1,0:T(1,128)}', space=vmem, size = 0x12000, scoped, tag = 'internal scratch']
  %s0 = inlined_call_operand.vmem [shape: f32[2,4,290], index: 0, kind: input, shape index: {}]
  %s1 = inlined_call_operand.vmem [shape: f32[9,4,1], index: 1, kind: input, shape index: {}]
  %s2 = inlined_call_operand.vmem [shape: f32[4,1], index: 2, kind: input, shape index: {}]
  %s3 = inlined_call_operand.vmem [shape: f32[4,1], index: 3, kind: input, shape index: {}]
  %s4 = inlined_call_operand.vmem [shape: f32[4,1], index: 4, kind: input, shape index: {}]
  %s5 = inlined_call_operand.vmem [shape: f32[8,4], index: 5, kind: input, shape index: {}]
  %s6 = inlined_call_operand.vmem [shape: f32[8], index: 6, kind: input, shape index: {}]
  %s7 = inlined_call_operand.hbm [shape: f32[2,8,256], index: 7, kind: output, shape index: {}]
  %s8 = sld [smem:[#allocation0]]
  $region69: #{tpu_custom_call.1} parent=0
    _
  %s10 = ssub.s32 1, %s8
  %s11 = scalar_select 0, %s10, %s8
  $region1: #{tpu_custom_call.1} parent=0
    #allocation2 [shape = 'u8[4096]{0}', space=smem, size = 0x1000, scoped, tag = 'input window, operand 5, single buffered']
    #allocation3 [shape = 's32[2]{0}', space=sflag, size = 0x8, scoped, tag = 'scoped memory for tpu_custom_call.1']
    #allocation4 [shape = 's32[2]{0}', space=sflag, size = 0x8, scoped, tag = 'scoped memory for tpu_custom_call.1']
    #allocation5 [shape = 'u8[512]{0}', space=smem, size = 0x200, scoped, tag = 'input window, operand 6, single buffered']
    #allocation6 [shape = 's32[1]{0}', space=sflag, size = 0x4, scoped, tag = 'scoped memory for tpu_custom_call.1']
    #allocation7 [shape = 'u8[16384]{0}', space=vmem, size = 0x4000, scoped, tag = 'output window, operand 0']
    %12 = vsyncpa [#allocation4], 0
    %13 = vsyncpa [#allocation6], 0
    %14 = vsyncpa [#allocation3], 0
    %s15 = scalar_lea.sflag [#allocation3], 1
    %16 = vsyncpa %s15, 0
    loop: start=0, step=1, limit=4
    $region2: #{tpu_custom_call.1} parent=1 // loop_pre_header
      _
    $region3: #{tpu_custom_call.1} parent=1 // loop_header
      %s18 = sphi 0, %s22
      %p19 = scmp.ge.s32.totalorder %s18, 4
      %s28 = sphi 0, %s30
      %s31 = sphi 0, %s28
      %s32 = sphi 0, %s31
      %s48 = sphi 0, %s32
      %s52 = sphi 0, %s52
      %s54 = sphi 0, %s52
      %s55 = sphi 0, %s54
      %s69 = sphi 0, %s55
      %s73 = sphi 0, %s73
      %s75 = sphi 0, %s73
      %s76 = sphi 0, %s75
      %s90 = sphi 0, %s76
      %s94 = sphi 0, %s94
      %s96 = sphi 0, %s94
      %s97 = sphi 0, %s96
      %s111 = sphi 0, %s97
      %s115 = sphi 0, %s115
      %s117 = sphi 0, %s115
      %s118 = sphi 0, %s117
      %s132 = sphi 0, %s118
      %s136 = sphi 0, %s136
      %s138 = sphi 0, %s136
      %s139 = sphi 0, %s138
      %s153 = sphi 0, %s139
      %s157 = sphi 0, %s157
      %s159 = sphi 0, %s157
      %s160 = sphi 0, %s159
      %s174 = sphi 0, %s160
      %s180 = sphi 0, %s182
      %s183 = sphi 0, %s180
      %s184 = sphi 0, %s183
      %s200 = sphi 0, %s184
    $region4: #{tpu_custom_call.1} parent=1 // loop_header_branch
      %21 = sbr.rel (%p19) target = $region8
    $region5: #{tpu_custom_call.1} parent=1 // loop_body
      %s23 = ssub.s32 %s18, 1
      %s24 = ssub.s32 %s18, 2
      %s25 = sadd.s32 %s18, 1
      %s26 = ssub.s32 %s18, %s25
      %p27 = scmp.eq.s32.totalorder %s26, 0
      %s29 = sadd.s32 %s28, 1
      %s30 = scalar_select %p27, %s28, %s29
      %p33 = pneg %p27
      %p34 = scmp.eq.s32.totalorder %s18, 1
      %p35 = por %p33, %p34
      %p36 = scmp.ne.s32.totalorder %s28, %s31
      %p37 = scmp.eq.s32.totalorder %s18, 0
      %p38 = por %p36, %p37
      %p39 = scmp.ne.s32.totalorder %s28, %s31
      %p40 = scmp.eq.s32.totalorder %s23, 1
      %p41 = por %p39, %p40
      %p42 = scmp.ne.s32.totalorder %s31, %s32
      %p43 = scmp.eq.s32.totalorder %s23, 0
      %p44 = por %p42, %p43
      %p45 = scmp.ne.s32.totalorder %s31, %s32
      %p46 = scmp.eq.s32.totalorder %s24, 1
      %p47 = por %p45, %p46
      %p49 = scmp.ne.s32.totalorder %s32, %s48
      %p50 = scmp.eq.s32.totalorder %s24, 0
      %p51 = por %p49, %p50
      %s53 = sadd.s32 %s52, 1
      %p56 = scmp.eq.s32.totalorder %s18, 1
      %p57 = scmp.ne.s32.totalorder %s52, %s54
      %p58 = scmp.eq.s32.totalorder %s18, 0
      %p59 = por %p57, %p58
      %p60 = scmp.ne.s32.totalorder %s52, %s54
      %p61 = scmp.eq.s32.totalorder %s23, 1
      %p62 = por %p60, %p61
      %p63 = scmp.ne.s32.totalorder %s54, %s55
      %p64 = scmp.eq.s32.totalorder %s23, 0
      %p65 = por %p63, %p64
      %p66 = scmp.ne.s32.totalorder %s54, %s55
      %p67 = scmp.eq.s32.totalorder %s24, 1
      %p68 = por %p66, %p67
      %p70 = scmp.ne.s32.totalorder %s55, %s69
      %p71 = scmp.eq.s32.totalorder %s24, 0
      %p72 = por %p70, %p71
      %s74 = sadd.s32 %s73, 1
      %p77 = scmp.eq.s32.totalorder %s18, 1
      %p78 = scmp.ne.s32.totalorder %s73, %s75
      %p79 = scmp.eq.s32.totalorder %s18, 0
      %p80 = por %p78, %p79
      %p81 = scmp.ne.s32.totalorder %s73, %s75
      %p82 = scmp.eq.s32.totalorder %s23, 1
      %p83 = por %p81, %p82
      %p84 = scmp.ne.s32.totalorder %s75, %s76
      %p85 = scmp.eq.s32.totalorder %s23, 0
      %p86 = por %p84, %p85
      %p87 = scmp.ne.s32.totalorder %s75, %s76
      %p88 = scmp.eq.s32.totalorder %s24, 1
      %p89 = por %p87, %p88
      %p91 = scmp.ne.s32.totalorder %s76, %s90
      %p92 = scmp.eq.s32.totalorder %s24, 0
      %p93 = por %p91, %p92
      %s95 = sadd.s32 %s94, 1
      %p98 = scmp.eq.s32.totalorder %s18, 1
      %p99 = scmp.ne.s32.totalorder %s94, %s96
      %p100 = scmp.eq.s32.totalorder %s18, 0
      %p101 = por %p99, %p100
      %p102 = scmp.ne.s32.totalorder %s94, %s96
      %p103 = scmp.eq.s32.totalorder %s23, 1
      %p104 = por %p102, %p103
      %p105 = scmp.ne.s32.totalorder %s96, %s97
      %p106 = scmp.eq.s32.totalorder %s23, 0
      %p107 = por %p105, %p106
      %p108 = scmp.ne.s32.totalorder %s96, %s97
      %p109 = scmp.eq.s32.totalorder %s24, 1
      %p110 = por %p108, %p109
      %p112 = scmp.ne.s32.totalorder %s97, %s111
      %p113 = scmp.eq.s32.totalorder %s24, 0
      %p114 = por %p112, %p113
      %s116 = sadd.s32 %s115, 1
      %p119 = scmp.eq.s32.totalorder %s18, 1
      %p120 = scmp.ne.s32.totalorder %s115, %s117
      %p121 = scmp.eq.s32.totalorder %s18, 0
      %p122 = por %p120, %p121
      %p123 = scmp.ne.s32.totalorder %s115, %s117
      %p124 = scmp.eq.s32.totalorder %s23, 1
      %p125 = por %p123, %p124
      %p126 = scmp.ne.s32.totalorder %s117, %s118
      %p127 = scmp.eq.s32.totalorder %s23, 0
      %p128 = por %p126, %p127
      %p129 = scmp.ne.s32.totalorder %s117, %s118
      %p130 = scmp.eq.s32.totalorder %s24, 1
      %p131 = por %p129, %p130
      %p133 = scmp.ne.s32.totalorder %s118, %s132
      %p134 = scmp.eq.s32.totalorder %s24, 0
      %p135 = por %p133, %p134
      %s137 = sadd.s32 %s136, 1
      %p140 = scmp.eq.s32.totalorder %s18, 1
      %p141 = scmp.ne.s32.totalorder %s136, %s138
      %p142 = scmp.eq.s32.totalorder %s18, 0
      %p143 = por %p141, %p142
      %p144 = scmp.ne.s32.totalorder %s136, %s138
      %p145 = scmp.eq.s32.totalorder %s23, 1
      %p146 = por %p144, %p145
      %p147 = scmp.ne.s32.totalorder %s138, %s139
      %p148 = scmp.eq.s32.totalorder %s23, 0
      %p149 = por %p147, %p148
      %p150 = scmp.ne.s32.totalorder %s138, %s139
      %p151 = scmp.eq.s32.totalorder %s24, 1
      %p152 = por %p150, %p151
      %p154 = scmp.ne.s32.totalorder %s139, %s153
      %p155 = scmp.eq.s32.totalorder %s24, 0
      %p156 = por %p154, %p155
      %s158 = sadd.s32 %s157, 1
      %p161 = scmp.eq.s32.totalorder %s18, 1
      %p162 = scmp.ne.s32.totalorder %s157, %s159
      %p163 = scmp.eq.s32.totalorder %s18, 0
      %p164 = por %p162, %p163
      %p165 = scmp.ne.s32.totalorder %s157, %s159
      %p166 = scmp.eq.s32.totalorder %s23, 1
      %p167 = por %p165, %p166
      %p168 = scmp.ne.s32.totalorder %s159, %s160
      %p169 = scmp.eq.s32.totalorder %s23, 0
      %p170 = por %p168, %p169
      %p171 = scmp.ne.s32.totalorder %s159, %s160
      %p172 = scmp.eq.s32.totalorder %s24, 1
      %p173 = por %p171, %p172
      %p175 = scmp.ne.s32.totalorder %s160, %s174
      %p176 = scmp.eq.s32.totalorder %s24, 0
      %p177 = por %p175, %p176
      %s178 = ssub.s32 %s18, %s25
      %p179 = scmp.eq.s32.totalorder %s178, 0
      %s181 = sadd.s32 %s180, 1
      %s182 = scalar_select %p179, %s180, %s181
      %p185 = pneg %p179
      %p186 = scmp.eq.s32.totalorder %s18, 1
      %p187 = por %p185, %p186
      %p188 = scmp.ne.s32.totalorder %s180, %s183
      %p189 = scmp.eq.s32.totalorder %s18, 0
      %p190 = por %p188, %p189
      %p191 = scmp.ne.s32.totalorder %s180, %s183
      %p192 = scmp.eq.s32.totalorder %s23, 1
      %p193 = por %p191, %p192
      %p194 = scmp.ne.s32.totalorder %s183, %s184
      %p195 = scmp.eq.s32.totalorder %s23, 0
      %p196 = por %p194, %p195
      %p197 = scmp.ne.s32.totalorder %s183, %s184
      %p198 = scmp.eq.s32.totalorder %s24, 1
      %p199 = por %p197, %p198
      %p201 = scmp.ne.s32.totalorder %s184, %s200
      %p202 = scmp.eq.s32.totalorder %s24, 0
      %p203 = por %p201, %p202
      %p204 = scmp.le.s32.totalorder 1, %s18
      %p205 = scmp.lt.s32.totalorder %s18, 3
      %p206 = pnand %p204, %p205
      %p207 = pneg %p206
      // Predicated region
      $region9: #{tpu_custom_call.1} parent=5 // pred_check
        _
      $region10: #{tpu_custom_call.1} parent=5 // pred_check_branch
        %209 = sbr.rel (%p206) target = $region12
      $region11: #{tpu_custom_call.1} parent=5 // pred_region
        %s210 = ssub.s32 %s18, 1
        // Predicated region
        $region13: #{tpu_custom_call.1} parent=11 // pred_check
          %p211 = pneg %p65
        $region14: #{tpu_custom_call.1} parent=11 // pred_check_branch
          %213 = sbr.rel (%p211) target = $region16
        $region15: #{tpu_custom_call.1} parent=11 // pred_region
          _
        $region16: #{tpu_custom_call.1} parent=11 // pred_fallthru
          _
        // Predicated region
        $region17: #{tpu_custom_call.1} parent=11 // pred_check
          %p214 = pneg %p86
        $region18: #{tpu_custom_call.1} parent=11 // pred_check_branch
          %216 = sbr.rel (%p214) target = $region20
        $region19: #{tpu_custom_call.1} parent=11 // pred_region
          _
        $region20: #{tpu_custom_call.1} parent=11 // pred_fallthru
          _
        // Predicated region
        $region21: #{tpu_custom_call.1} parent=11 // pred_check
          %p217 = pneg %p107
        $region22: #{tpu_custom_call.1} parent=11 // pred_check_branch
          %219 = sbr.rel (%p217) target = $region24
        $region23: #{tpu_custom_call.1} parent=11 // pred_region
          _
        $region24: #{tpu_custom_call.1} parent=11 // pred_fallthru
          _
        // Predicated region
        $region25: #{tpu_custom_call.1} parent=11 // pred_check
          %p220 = pneg %p128
        $region26: #{tpu_custom_call.1} parent=11 // pred_check_branch
          %222 = sbr.rel (%p220) target = $region28
        $region27: #{tpu_custom_call.1} parent=11 // pred_region
          _
        $region28: #{tpu_custom_call.1} parent=11 // pred_fallthru
          _
        // Predicated region
        $region29: #{tpu_custom_call.1} parent=11 // pred_check
          %p223 = pneg %p149
        $region30: #{tpu_custom_call.1} parent=11 // pred_check_branch
          %225 = sbr.rel (%p223) target = $region32
        $region31: #{tpu_custom_call.1} parent=11 // pred_region
          %s227 = ssub.s32 128, 128
          %228 = vsyncadd [#allocation4], %s227
          %s230 = sshll.u32 %s5, 4
          %s231 = int_to_ptr.vmem [resolvable:$true] %s230
          %233 = dma.vmem_to_smem %s231, 128, [#allocation2], [#allocation4]
        $region32: #{tpu_custom_call.1} parent=11 // pred_fallthru
          _
        // Predicated region
        $region33: #{tpu_custom_call.1} parent=11 // pred_check
          %p234 = pneg %p170
        $region34: #{tpu_custom_call.1} parent=11 // pred_check_branch
          %236 = sbr.rel (%p234) target = $region36
        $region35: #{tpu_custom_call.1} parent=11 // pred_region
          %s238 = ssub.s32 16, 16
          %239 = vsyncadd [#allocation6], %s238
          %s241 = sshll.u32 %s6, 4
          %s242 = int_to_ptr.vmem [resolvable:$true] %s241
          %244 = dma.vmem_to_smem %s242, 16, [#allocation5], [#allocation6]
        $region36: #{tpu_custom_call.1} parent=11 // pred_fallthru
          _
      $region12: #{tpu_custom_call.1} parent=5 // pred_fallthru
        _
      %p245 = scmp.lt.s32.totalorder %s18, 2
      // Predicated region
      $region37: #{tpu_custom_call.1} parent=5 // pred_check
        %p246 = pneg %p245
      $region38: #{tpu_custom_call.1} parent=5 // pred_check_branch
        %248 = sbr.rel (%p246) target = $region40
      $region39: #{tpu_custom_call.1} parent=5 // pred_region
        // Predicated region
        $region41: #{tpu_custom_call.1} parent=39 // pred_check
          %p249 = pneg %p38
        $region42: #{tpu_custom_call.1} parent=39 // pred_check_branch
          %251 = sbr.rel (%p249) target = $region44
        $region43: #{tpu_custom_call.1} parent=39 // pred_region
          %p252 = scmp.lt.s32.totalorder %s18, 1
          %s253 = scalar_select %p252, %s18, 1
          %s254 = smul.addr %s253, 3
          %s255 = smul.addr %s254, 4
          %s256 = scalar_lea.vmem %s0, %s255
        $region44: #{tpu_custom_call.1} parent=39 // pred_fallthru
          _
      $region40: #{tpu_custom_call.1} parent=5 // pred_fallthru
        _
      %p257 = scmp.le.s32.totalorder 1, %s18
      %p258 = scmp.lt.s32.totalorder %s18, 3
      %p259 = pnand %p257, %p258
      %p260 = pneg %p259
      // Predicated region
      $region45: #{tpu_custom_call.1} parent=5 // pred_check
        _
      $region46: #{tpu_custom_call.1} parent=5 // pred_check_branch
        %262 = sbr.rel (%p259) target = $region48
      $region47: #{tpu_custom_call.1} parent=5 // pred_region
        %s263 = ssub.s32 %s18, 1
        // Predicated region
        $region49: #{tpu_custom_call.1} parent=47 // pred_check
          %p264 = pneg %p149
        $region50: #{tpu_custom_call.1} parent=47 // pred_check_branch
          %266 = sbr.rel (%p264) target = $region52
        $region51: #{tpu_custom_call.1} parent=47 // pred_region
          %267 = dma.done [#allocation4], 128
        $region52: #{tpu_custom_call.1} parent=47 // pred_fallthru
          _
        // Predicated region
        $region53: #{tpu_custom_call.1} parent=47 // pred_check
          %p268 = pneg %p170
        $region54: #{tpu_custom_call.1} parent=47 // pred_check_branch
          %270 = sbr.rel (%p268) target = $region56
        $region55: #{tpu_custom_call.1} parent=47 // pred_region
          %271 = dma.done [#allocation6], 16
        $region56: #{tpu_custom_call.1} parent=47 // pred_fallthru
          _
        %272 = sfence
        %p273 = scmp.lt.s32.totalorder %s23, 1
        %s274 = scalar_select %p273, %s23, 1
        %s275 = smul.addr %s274, 3
        %s276 = smul.addr %s275, 4
        %s277 = scalar_lea.vmem %s0, %s276
        %p278 = pneg %p44
        %p279 = pneg %p41
        %p280 = pneg %p65
        %p281 = pneg %p62
        %p282 = pneg %p86
        %p283 = pneg %p83
        %p284 = pneg %p107
        %p285 = pneg %p104
        %p286 = pneg %p128
        %p287 = pneg %p125
        %p288 = pneg %p149
        %p289 = pneg %p146
        %p290 = pneg %p170
        %p291 = pneg %p167
        %p292 = pneg %p196
        %p293 = pneg %p193
        %s294 = sand.u32 %s183, 1
        %s295 = scalar_lea.sflag [#allocation3], %s294
        %s296 = sand.u32 %s183, 1
        %s297 = smul.addr %s296, 16
        %s298 = scalar_lea.vmem [#allocation7], %s297
        %p299 = scmp.lt.s32.totalorder %s23, 1
        %s300 = scalar_select %p299, %s23, 1
        %s301 = smul.addr %s300, 3
        %s302 = smul.addr %s301, 4
        %s303 = scalar_lea.vmem %s0, %s302
        %v304 = vlaneseq
        %v305 = vand.u32 %v304, 127
        %v306 = vadd.s32 %v305, 128
        %vm307 = vcmp.lt.s32.totalorder %v305, 0
        %v308 = vsub.s32 0, %v305
        %v309 = vsel %vm307, %v308, %v305
        %v310 = vshrl.u32 %v309, 4
        %v311 = vand.u32 %v309, 15
        %v312 = vsub.s32 0, %v311
        %v313 = vsel %vm307, %v312, %v311
        %vm314 = vcmp.lt.s32.totalorder %v306, 0
        %v315 = vsub.s32 0, %v306
        %v316 = vsel %vm314, %v315, %v306
        %v317 = vshrl.u32 %v316, 4
        %v318 = vand.u32 %v316, 15
        %v319 = vsub.s32 0, %v318
        %v320 = vsel %vm314, %v319, %v318
        %vm321 = vcmp.ne.s32.totalorder %v313, 0
        %vm322 = vcmp.ne.s32.totalorder %v320, 0
        %vm323 = vcmp.lt.s32.totalorder %v313, 0
        %vm324 = vcmp.lt.s32.totalorder %v320, 0
        %vm325 = vmand %vm323, %vm321
        %vm326 = vmand %vm324, %vm322
        %v327 = vadd.s32 %v313, 16
        %v328 = vadd.s32 %v320, 16
        %v329 = vsel %vm325, %v327, %v313
        %v330 = vsel %vm326, %v328, %v320
        %v331 = vld [vmem:[%s303] sm:$0xff]
        %v332 = vld [vmem:[%s303 + $0x8] sm:$0xf]
        %s333 = scalar_lea.vmem %s1, 4
        %v334 = vld [vmem:[%s333] sm:$0xf]
        %336 = vset.pattern.permute.xlu0 0
        %337 = vperm.xlu0 %336, %v334
        %v338 = vpop.permute.xlu0 %337
        %v340 = vunpack.c.l.s4 839922192
        %v341 = vunpack.c.0.s8 %v340
        %v342 = vlaneseq
        %v343 = vshrl.u32 %v342, 7
        %v344 = vsub.s32 %v341, %v343
        %v345 = vrot.slane %v338, %v344
        %v347 = vmul.f32 %v331, %v345
        %v348 = vmul.f32 %v332, %v345
        %s349 = scalar_lea.vmem %s1, 16
        %v350 = vld [vmem:[%s349] sm:$0xf]
        %352 = vset.pattern.permute.xlu0 0
        %353 = vperm.xlu0 %352, %v350
        %v354 = vpop.permute.xlu0 %353
        %v356 = vunpack.c.l.s4 839922192
        %v357 = vunpack.c.0.s8 %v356
        %v358 = vlaneseq
        %v359 = vshrl.u32 %v358, 7
        %v360 = vsub.s32 %v357, %v359
        %v361 = vrot.slane %v354, %v360
        %v363 = vmul.f32 %v331, %v361
        %v364 = vmul.f32 %v332, %v361
        %367 = vrot.lane.b32.xlu0 %v363, 112
        %v368 = vpop.permute.xlu0 %367
        %369 = vrot.lane.b32.xlu0 %v364, 112
        %v370 = vpop.permute.xlu0 %369
        %v371 = vrot.slane %v368, 4
        %v372 = vrot.slane %v370, 4
        %vm373 = vcmask 1043456
        %v374 = vsel %vm373, %v371, %v372
        %vm375 = vcmask 916480
        %v376 = vsel %vm375, %v368, %v374
        %v379 = vadd.f32 %v347, %v376
        %v380 = vadd.f32 %v348, %v370
        %s381 = scalar_lea.vmem %s1, 28
        %v382 = vld [vmem:[%s381] sm:$0xf]
        %384 = vset.pattern.permute.xlu0 0
        %385 = vperm.xlu0 %384, %v382
        %v386 = vpop.permute.xlu0 %385
        %v388 = vunpack.c.l.s4 839922192
        %v389 = vunpack.c.0.s8 %v388
        %v390 = vlaneseq
        %v391 = vshrl.u32 %v390, 7
        %v392 = vsub.s32 %v389, %v391
        %v393 = vrot.slane %v386, %v392
        %v395 = vmul.f32 %v331, %v393
        %v396 = vmul.f32 %v332, %v393
        %399 = vrot.lane.b32.xlu0 %v395, 96
        %v400 = vpop.permute.xlu0 %399
        %401 = vrot.lane.b32.xlu0 %v396, 96
        %v402 = vpop.permute.xlu0 %401
        %v403 = vrot.slane %v400, 4
        %v404 = vrot.slane %v402, 4
        %v405 = vsel %vm373, %v403, %v404
        %vm406 = vcmask 785408
        %v407 = vsel %vm406, %v400, %v405
        %v410 = vadd.f32 %v379, %v407
        %v411 = vadd.f32 %v380, %v402
        %v412 = vadd.s32 %v329, 4294967295
        %v413 = vadd.s32 %v330, 4294967295
        %vm414 = vcmp.ge.s32.totalorder %v412, 0
        %vm415 = vcmp.ge.s32.totalorder %v413, 0
        %vm416 = vcmp.lt.s32.totalorder %v412, 16
        %vm417 = vcmp.lt.s32.totalorder %v413, 16
        %vm418 = vmand %vm414, %vm416
        %vm419 = vmand %vm415, %vm417
        %v420 = vld [vmem:[%s303] sm:$0xff]
        %v421 = vld [vmem:[%s1] sm:$0xf]
        %423 = vset.pattern.permute.xlu0 0
        %424 = vperm.xlu0 %423, %v421
        %v425 = vpop.permute.xlu0 %424
        %v427 = vunpack.c.l.s4 839922192
        %v428 = vunpack.c.0.s8 %v427
        %v429 = vlaneseq
        %v430 = vshrl.u32 %v429, 7
        %v431 = vsub.s32 %v428, %v430
        %v432 = vrot.slane %v425, %v431
        %v434 = vmul.f32 %v420, %v432
        %s435 = scalar_lea.vmem %s1, 12
        %v436 = vld [vmem:[%s435] sm:$0xf]
        %438 = vset.pattern.permute.xlu0 0
        %439 = vperm.xlu0 %438, %v436
        %v440 = vpop.permute.xlu0 %439
        %v442 = vunpack.c.l.s4 839922192
        %v443 = vunpack.c.0.s8 %v442
        %v444 = vlaneseq
        %v445 = vshrl.u32 %v444, 7
        %v446 = vsub.s32 %v443, %v445
        %v447 = vrot.slane %v440, %v446
        %v449 = vmul.f32 %v331, %v447
        %v450 = vmul.f32 %v332, %v447
        %453 = vrot.lane.b32.xlu0 %v449, 112
        %v454 = vpop.permute.xlu0 %453
        %455 = vrot.lane.b32.xlu0 %v450, 112
        %v456 = vpop.permute.xlu0 %455
        %v457 = vrot.slane %v454, 4
        %v458 = vrot.slane %v456, 4
        %v459 = vsel %vm373, %v457, %v458
        %v460 = vsel %vm375, %v454, %v459
        %v462 = vadd.f32 %v434, %v460
        %s463 = scalar_lea.vmem %s1, 24
        %v464 = vld [vmem:[%s463] sm:$0xf]
        %466 = vset.pattern.permute.xlu0 0
        %467 = vperm.xlu0 %466, %v464
        %v468 = vpop.permute.xlu0 %467
        %v470 = vunpack.c.l.s4 839922192
        %v471 = vunpack.c.0.s8 %v470
        %v472 = vlaneseq
        %v473 = vshrl.u32 %v472, 7
        %v474 = vsub.s32 %v471, %v473
        %v475 = vrot.slane %v468, %v474
        %v477 = vmul.f32 %v331, %v475
        %v478 = vmul.f32 %v332, %v475
        %481 = vrot.lane.b32.xlu0 %v477, 96
        %v482 = vpop.permute.xlu0 %481
        %483 = vrot.lane.b32.xlu0 %v478, 96
        %v484 = vpop.permute.xlu0 %483
        %v485 = vrot.slane %v482, 4
        %v486 = vrot.slane %v484, 4
        %v487 = vsel %vm373, %v485, %v486
        %v488 = vsel %vm406, %v482, %v487
        %v490 = vadd.f32 %v462, %v488
        %v491 = vsel %vm418, 1, 0
        %v492 = vsel %vm419, 1, 0
        %vm493 = vcmp.eq.s32.totalorder %v491, 1
        %vm494 = vcmp.eq.s32.totalorder %v492, 1
        %v496 = vcombine.high %v490, %v490
        %v498 = vsel %vm493, %v490, 0.0
        %v499 = vsel %vm494, %v496, 0.0
        %v502 = vcombine.low %v498, %v499
        %503 = vrot.lane.b32.xlu0 %v502, 1
        %v504 = vpop.permute.xlu0 %503
        %v505 = vrot.slane %v504, 4
        %vm506 = vcmask 7168
        %v507 = vsel %vm506, %v505, %v504
        %v510 = vadd.f32 %v410, %v507
        %v511 = vadd.f32 %v411, %v505
        %v512 = vadd.s32 %v329, 1
        %v513 = vadd.s32 %v330, 1
        %vm514 = vcmp.ge.s32.totalorder %v512, 0
        %vm515 = vcmp.ge.s32.totalorder %v513, 0
        %vm516 = vcmp.lt.s32.totalorder %v512, 16
        %vm517 = vcmp.lt.s32.totalorder %v513, 16
        %vm518 = vmand %vm514, %vm516
        %vm519 = vmand %vm515, %vm517
        %v520 = vld [vmem:[%s303] sm:$0xff]
        %v521 = vld [vmem:[%s303 + $0x8] sm:$0xf]
        %s522 = scalar_lea.vmem %s1, 8
        %v523 = vld [vmem:[%s522] sm:$0xf]
        %525 = vset.pattern.permute.xlu0 0
        %526 = vperm.xlu0 %525, %v523
        %v527 = vpop.permute.xlu0 %526
        %v529 = vunpack.c.l.s4 839922192
        %v530 = vunpack.c.0.s8 %v529
        %v531 = vlaneseq
        %v532 = vshrl.u32 %v531, 7
        %v533 = vsub.s32 %v530, %v532
        %v534 = vrot.slane %v527, %v533
        %v536 = vmul.f32 %v520, %v534
        %v537 = vmul.f32 %v521, %v534
        %s538 = scalar_lea.vmem %s1, 20
        %v539 = vld [vmem:[%s538] sm:$0xf]
        %541 = vset.pattern.permute.xlu0 0
        %542 = vperm.xlu0 %541, %v539
        %v543 = vpop.permute.xlu0 %542
        %v545 = vunpack.c.l.s4 839922192
        %v546 = vunpack.c.0.s8 %v545
        %v547 = vlaneseq
        %v548 = vshrl.u32 %v547, 7
        %v549 = vsub.s32 %v546, %v548
        %v550 = vrot.slane %v543, %v549
        %v552 = vmul.f32 %v520, %v550
        %v553 = vmul.f32 %v521, %v550
        %556 = vrot.lane.b32.xlu0 %v552, 112
        %v557 = vpop.permute.xlu0 %556
        %558 = vrot.lane.b32.xlu0 %v553, 112
        %v559 = vpop.permute.xlu0 %558
        %v560 = vrot.slane %v557, 4
        %v561 = vrot.slane %v559, 4
        %v562 = vsel %vm373, %v560, %v561
        %v563 = vsel %vm375, %v557, %v562
        %v566 = vadd.f32 %v536, %v563
        %v567 = vadd.f32 %v537, %v559
        %s568 = scalar_lea.vmem %s1, 32
        %v569 = vld [vmem:[%s568] sm:$0xf]
        %571 = vset.pattern.permute.xlu0 0
        %572 = vperm.xlu0 %571, %v569
        %v573 = vpop.permute.xlu0 %572
        %v575 = vunpack.c.l.s4 839922192
        %v576 = vunpack.c.0.s8 %v575
        %v577 = vlaneseq
        %v578 = vshrl.u32 %v577, 7
        %v579 = vsub.s32 %v576, %v578
        %v580 = vrot.slane %v573, %v579
        %v582 = vmul.f32 %v520, %v580
        %v583 = vmul.f32 %v521, %v580
        %586 = vrot.lane.b32.xlu0 %v582, 96
        %v587 = vpop.permute.xlu0 %586
        %588 = vrot.lane.b32.xlu0 %v583, 96
        %v589 = vpop.permute.xlu0 %588
        %v590 = vrot.slane %v587, 4
        %v591 = vrot.slane %v589, 4
        %v592 = vsel %vm373, %v590, %v591
        %v593 = vsel %vm406, %v587, %v592
        %v596 = vadd.f32 %v566, %v593
        %v597 = vadd.f32 %v567, %v589
        %v598 = vsel %vm518, 1, 0
        %v599 = vsel %vm519, 1, 0
        %vm600 = vcmp.eq.s32.totalorder %v598, 1
        %vm601 = vcmp.eq.s32.totalorder %v599, 1
        %v604 = vcombine.high %v596, %v596
        %605 = vrot.lane.b32.xlu0 %v596, 126
        %v606 = vpop.permute.xlu0 %605
        %607 = vrot.lane.b32.xlu0 %v604, 126
        %v608 = vpop.permute.xlu0 %607
        %609 = vrot.lane.b32.xlu0 %v597, 126
        %v610 = vpop.permute.xlu0 %609
        %vm611 = vcmask 1031168
        %v612 = vsel %vm611, %v606, %v608
        %v613 = vsel %vm611, %v608, %v610
        %v616 = vsel %vm600, %v612, 0.0
        %v617 = vsel %vm601, %v613, 0.0
        %v620 = vcombine.low %v616, %v617
        %621 = vrot.lane.b32.xlu0 %v620, 1
        %v622 = vpop.permute.xlu0 %621
        %v623 = vrot.slane %v622, 4
        %v624 = vsel %vm506, %v623, %v622
        %v627 = vadd.f32 %v510, %v624
        %v628 = vadd.f32 %v511, %v623
        %v629 = vld [vmem:[%s2] sm:$0xf]
        %631 = vset.pattern.permute.xlu0 0
        %632 = vperm.xlu0 %631, %v629
        %v633 = vpop.permute.xlu0 %632
        %v635 = vunpack.c.l.s4 839922192
        %v636 = vunpack.c.0.s8 %v635
        %v637 = vlaneseq
        %v638 = vshrl.u32 %v637, 7
        %v639 = vsub.s32 %v636, %v638
        %v640 = vrot.slane %v633, %v639
        %v642 = vadd.f32 %v627, %v640
        %v643 = vadd.f32 %v628, %v640
        %v646 = vcombine.high %v642, %v642
        %647 = vrot.lane.b32.xlu0 %v642, 127
        %v648 = vpop.permute.xlu0 %647
        %649 = vrot.lane.b32.xlu0 %v646, 127
        %v650 = vpop.permute.xlu0 %649
        %651 = vrot.lane.b32.xlu0 %v643, 127
        %v652 = vpop.permute.xlu0 %651
        %vm653 = vcmask 1039360
        %v654 = vsel %vm653, %v648, %v650
        %v655 = vsel %vm653, %v650, %v652
        %v658 = vsel %vm373, %v654, 0.0
        %v659 = vsel %vm373, %v655, 0.0
        %v660 = vadd.f32 %v658, %v659
        %661 = vadd.xlane.f32.xlu0 %v660
        %v662 = vpop.xlane.xlu0 %661
        %v663 = vmul.f32 %v642, %v642
        %v664 = vmul.f32 %v643, %v643
        %v667 = vcombine.high %v663, %v663
        %668 = vrot.lane.b32.xlu0 %v663, 127
        %v669 = vpop.permute.xlu0 %668
        %670 = vrot.lane.b32.xlu0 %v667, 127
        %v671 = vpop.permute.xlu0 %670
        %672 = vrot.lane.b32.xlu0 %v664, 127
        %v673 = vpop.permute.xlu0 %672
        %v674 = vsel %vm653, %v669, %v671
        %v675 = vsel %vm653, %v671, %v673
        %v678 = vsel %vm373, %v674, 0.0
        %v679 = vsel %vm373, %v675, 0.0
        %v680 = vadd.f32 %v678, %v679
        %681 = vadd.xlane.f32.xlu0 %v680
        %v682 = vpop.xlane.xlu0 %681
        %v683 = vadd.f32 %v662, 0.0
        %v684 = vadd.f32 %v682, 0.0
        %v685 = vmul.f32 %v683, 0.00390625
        %v686 = vmul.f32 %v684, 0.00390625
        %v687 = vmul.f32 %v685, %v685
        %v688 = vsub.f32 %v686, %v687
        %v689 = vmax.f32 %v688, 0.0
        %v690 = vadd.f32 %v689, 1e-05
        %v691 = vrsqrt.pop %v690
        %v692 = vld [vmem:[%s3] sm:$0xf]
        %v693 = vmul.f32 %v691, %v692
        %v694 = vld [vmem:[%s4] sm:$0xf]
        %v695 = vmul.f32 %v685, %v693
        %v696 = vsub.f32 %v694, %v695
        %698 = vset.pattern.permute.xlu0 0
        %699 = vperm.xlu0 %698, %v693
        %v700 = vpop.permute.xlu0 %699
        %v702 = vunpack.c.l.s4 839922192
        %v703 = vunpack.c.0.s8 %v702
        %v704 = vlaneseq
        %v705 = vshrl.u32 %v704, 7
        %v706 = vsub.s32 %v703, %v705
        %v707 = vrot.slane %v700, %v706
        %v709 = vmul.f32 %v642, %v707
        %v710 = vmul.f32 %v643, %v707
        %712 = vset.pattern.permute.xlu0 0
        %713 = vperm.xlu0 %712, %v696
        %v714 = vpop.permute.xlu0 %713
        %v716 = vunpack.c.l.s4 839922192
        %v717 = vunpack.c.0.s8 %v716
        %v718 = vlaneseq
        %v719 = vshrl.u32 %v718, 7
        %v720 = vsub.s32 %v717, %v719
        %v721 = vrot.slane %v714, %v720
        %v723 = vadd.f32 %v709, %v721
        %v724 = vadd.f32 %v710, %v721
        %s725 = sld [smem:[#allocation2]]
        %v726 = vstv %s725
        %v727 = vmul.f32 %v726, %v723
        %v728 = vmul.f32 %v726, %v724
        %s729 = sld [smem:[#allocation2 + $0x1]]
        %v730 = vstv %s729
        %v731 = vmul.f32 %v730, %v723
        %v732 = vmul.f32 %v730, %v724
        %v735 = vrot.slane %v731, 5
        %v736 = vrot.slane %v735, 4
        %v737 = vrot.slane %v732, 5
        %v738 = vrot.slane %v737, 4
        %v741 = vadd.f32 %v727, %v736
        %v742 = vadd.f32 %v728, %v738
        %s743 = sld [smem:[#allocation2 + $0x2]]
        %v744 = vstv %s743
        %v745 = vmul.f32 %v744, %v723
        %v746 = vmul.f32 %v744, %v724
        %v749 = vrot.slane %v745, 6
        %v750 = vrot.slane %v749, 4
        %v751 = vrot.slane %v746, 6
        %v752 = vrot.slane %v751, 4
        %v755 = vadd.f32 %v741, %v750
        %v756 = vadd.f32 %v742, %v752
        %s757 = sld [smem:[#allocation2 + $0x3]]
        %v758 = vstv %s757
        %v759 = vmul.f32 %v758, %v723
        %v760 = vmul.f32 %v758, %v724
        %v763 = vrot.slane %v759, 7
        %v764 = vrot.slane %v763, 4
        %v765 = vrot.slane %v760, 7
        %v766 = vrot.slane %v765, 4
        %v769 = vadd.f32 %v755, %v764
        %v770 = vadd.f32 %v756, %v766
        %s771 = sld [smem:[#allocation5]]
        %v772 = vstv %s771
        %v773 = vadd.f32 %v769, %v772
        %v774 = vadd.f32 %v770, %v772
        %s775 = sld [smem:[#allocation2 + $0x80]]
        %v776 = vstv %s775
        %v777 = vmul.f32 %v776, %v723
        %v778 = vmul.f32 %v776, %v724
        %s779 = sld [smem:[#allocation2 + $0x81]]
        %v780 = vstv %s779
        %v781 = vmul.f32 %v780, %v723
        %v782 = vmul.f32 %v780, %v724
        %v785 = vrot.slane %v781, 5
        %v786 = vrot.slane %v785, 4
        %v787 = vrot.slane %v782, 5
        %v788 = vrot.slane %v787, 4
        %v791 = vadd.f32 %v777, %v786
        %v792 = vadd.f32 %v778, %v788
        %s793 = sld [smem:[#allocation2 + $0x82]]
        %v794 = vstv %s793
        %v795 = vmul.f32 %v794, %v723
        %v796 = vmul.f32 %v794, %v724
        %v799 = vrot.slane %v795, 6
        %v800 = vrot.slane %v799, 4
        %v801 = vrot.slane %v796, 6
        %v802 = vrot.slane %v801, 4
        %v805 = vadd.f32 %v791, %v800
        %v806 = vadd.f32 %v792, %v802
        %s807 = sld [smem:[#allocation2 + $0x83]]
        %v808 = vstv %s807
        %v809 = vmul.f32 %v808, %v723
        %v810 = vmul.f32 %v808, %v724
        %v813 = vrot.slane %v809, 7
        %v814 = vrot.slane %v813, 4
        %v815 = vrot.slane %v810, 7
        %v816 = vrot.slane %v815, 4
        %v819 = vadd.f32 %v805, %v814
        %v820 = vadd.f32 %v806, %v816
        %s821 = sld [smem:[#allocation5 + $0x1]]
        %v822 = vstv %s821
        %v823 = vadd.f32 %v819, %v822
        %v824 = vadd.f32 %v820, %v822
        %s825 = sld [smem:[#allocation2 + $0x100]]
        %v826 = vstv %s825
        %v827 = vmul.f32 %v826, %v723
        %v828 = vmul.f32 %v826, %v724
        %s829 = sld [smem:[#allocation2 + $0x101]]
        %v830 = vstv %s829
        %v831 = vmul.f32 %v830, %v723
        %v832 = vmul.f32 %v830, %v724
        %v835 = vrot.slane %v831, 5
        %v836 = vrot.slane %v835, 4
        %v837 = vrot.slane %v832, 5
        %v838 = vrot.slane %v837, 4
        %v841 = vadd.f32 %v827, %v836
        %v842 = vadd.f32 %v828, %v838
        %s843 = sld [smem:[#allocation2 + $0x102]]
        %v844 = vstv %s843
        %v845 = vmul.f32 %v844, %v723
        %v846 = vmul.f32 %v844, %v724
        %v849 = vrot.slane %v845, 6
        %v850 = vrot.slane %v849, 4
        %v851 = vrot.slane %v846, 6
        %v852 = vrot.slane %v851, 4
        %v855 = vadd.f32 %v841, %v850
        %v856 = vadd.f32 %v842, %v852
        %s857 = sld [smem:[#allocation2 + $0x103]]
        %v858 = vstv %s857
        %v859 = vmul.f32 %v858, %v723
        %v860 = vmul.f32 %v858, %v724
        %v863 = vrot.slane %v859, 7
        %v864 = vrot.slane %v863, 4
        %v865 = vrot.slane %v860, 7
        %v866 = vrot.slane %v865, 4
        %v869 = vadd.f32 %v855, %v864
        %v870 = vadd.f32 %v856, %v866
        %s871 = sld [smem:[#allocation5 + $0x2]]
        %v872 = vstv %s871
        %v873 = vadd.f32 %v869, %v872
        %v874 = vadd.f32 %v870, %v872
        %s875 = sld [smem:[#allocation2 + $0x180]]
        %v876 = vstv %s875
        %v877 = vmul.f32 %v876, %v723
        %v878 = vmul.f32 %v876, %v724
        %s879 = sld [smem:[#allocation2 + $0x181]]
        %v880 = vstv %s879
        %v881 = vmul.f32 %v880, %v723
        %v882 = vmul.f32 %v880, %v724
        %v885 = vrot.slane %v881, 5
        %v886 = vrot.slane %v885, 4
        %v887 = vrot.slane %v882, 5
        %v888 = vrot.slane %v887, 4
        %v891 = vadd.f32 %v877, %v886
        %v892 = vadd.f32 %v878, %v888
        %s893 = sld [smem:[#allocation2 + $0x182]]
        %v894 = vstv %s893
        %v895 = vmul.f32 %v894, %v723
        %v896 = vmul.f32 %v894, %v724
        %v899 = vrot.slane %v895, 6
        %v900 = vrot.slane %v899, 4
        %v901 = vrot.slane %v896, 6
        %v902 = vrot.slane %v901, 4
        %v905 = vadd.f32 %v891, %v900
        %v906 = vadd.f32 %v892, %v902
        %s907 = sld [smem:[#allocation2 + $0x183]]
        %v908 = vstv %s907
        %v909 = vmul.f32 %v908, %v723
        %v910 = vmul.f32 %v908, %v724
        %v913 = vrot.slane %v909, 7
        %v914 = vrot.slane %v913, 4
        %v915 = vrot.slane %v910, 7
        %v916 = vrot.slane %v915, 4
        %v919 = vadd.f32 %v905, %v914
        %v920 = vadd.f32 %v906, %v916
        %s921 = sld [smem:[#allocation5 + $0x3]]
        %v922 = vstv %s921
        %v923 = vadd.f32 %v919, %v922
        %v924 = vadd.f32 %v920, %v922
        %s925 = sld [smem:[#allocation2 + $0x200]]
        %v926 = vstv %s925
        %v927 = vmul.f32 %v926, %v723
        %v928 = vmul.f32 %v926, %v724
        %s929 = sld [smem:[#allocation2 + $0x201]]
        %v930 = vstv %s929
        %v931 = vmul.f32 %v930, %v723
        %v932 = vmul.f32 %v930, %v724
        %v935 = vrot.slane %v931, 5
        %v936 = vrot.slane %v935, 4
        %v937 = vrot.slane %v932, 5
        %v938 = vrot.slane %v937, 4
        %v941 = vadd.f32 %v927, %v936
        %v942 = vadd.f32 %v928, %v938
        %s943 = sld [smem:[#allocation2 + $0x202]]
        %v944 = vstv %s943
        %v945 = vmul.f32 %v944, %v723
        %v946 = vmul.f32 %v944, %v724
        %v949 = vrot.slane %v945, 6
        %v950 = vrot.slane %v949, 4
        %v951 = vrot.slane %v946, 6
        %v952 = vrot.slane %v951, 4
        %v955 = vadd.f32 %v941, %v950
        %v956 = vadd.f32 %v942, %v952
        %s957 = sld [smem:[#allocation2 + $0x203]]
        %v958 = vstv %s957
        %v959 = vmul.f32 %v958, %v723
        %v960 = vmul.f32 %v958, %v724
        %v963 = vrot.slane %v959, 7
        %v964 = vrot.slane %v963, 4
        %v965 = vrot.slane %v960, 7
        %v966 = vrot.slane %v965, 4
        %v969 = vadd.f32 %v955, %v964
        %v970 = vadd.f32 %v956, %v966
        %s971 = sld [smem:[#allocation5 + $0x4]]
        %v972 = vstv %s971
        %v973 = vadd.f32 %v969, %v972
        %v974 = vadd.f32 %v970, %v972
        %s975 = sld [smem:[#allocation2 + $0x280]]
        %v976 = vstv %s975
        %v977 = vmul.f32 %v976, %v723
        %v978 = vmul.f32 %v976, %v724
        %s979 = sld [smem:[#allocation2 + $0x281]]
        %v980 = vstv %s979
        %v981 = vmul.f32 %v980, %v723
        %v982 = vmul.f32 %v980, %v724
        %v985 = vrot.slane %v981, 5
        %v986 = vrot.slane %v985, 4
        %v987 = vrot.slane %v982, 5
        %v988 = vrot.slane %v987, 4
        %v991 = vadd.f32 %v977, %v986
        %v992 = vadd.f32 %v978, %v988
        %s993 = sld [smem:[#allocation2 + $0x282]]
        %v994 = vstv %s993
        %v995 = vmul.f32 %v994, %v723
        %v996 = vmul.f32 %v994, %v724
        %v999 = vrot.slane %v995, 6
        %v1000 = vrot.slane %v999, 4
        %v1001 = vrot.slane %v996, 6
        %v1002 = vrot.slane %v1001, 4
        %v1005 = vadd.f32 %v991, %v1000
        %v1006 = vadd.f32 %v992, %v1002
        %s1007 = sld [smem:[#allocation2 + $0x283]]
        %v1008 = vstv %s1007
        %v1009 = vmul.f32 %v1008, %v723
        %v1010 = vmul.f32 %v1008, %v724
        %v1013 = vrot.slane %v1009, 7
        %v1014 = vrot.slane %v1013, 4
        %v1015 = vrot.slane %v1010, 7
        %v1016 = vrot.slane %v1015, 4
        %v1019 = vadd.f32 %v1005, %v1014
        %v1020 = vadd.f32 %v1006, %v1016
        %s1021 = sld [smem:[#allocation5 + $0x5]]
        %v1022 = vstv %s1021
        %v1023 = vadd.f32 %v1019, %v1022
        %v1024 = vadd.f32 %v1020, %v1022
        %s1025 = sld [smem:[#allocation2 + $0x300]]
        %v1026 = vstv %s1025
        %v1027 = vmul.f32 %v1026, %v723
        %v1028 = vmul.f32 %v1026, %v724
        %s1029 = sld [smem:[#allocation2 + $0x301]]
        %v1030 = vstv %s1029
        %v1031 = vmul.f32 %v1030, %v723
        %v1032 = vmul.f32 %v1030, %v724
        %v1035 = vrot.slane %v1031, 5
        %v1036 = vrot.slane %v1035, 4
        %v1037 = vrot.slane %v1032, 5
        %v1038 = vrot.slane %v1037, 4
        %v1041 = vadd.f32 %v1027, %v1036
        %v1042 = vadd.f32 %v1028, %v1038
        %s1043 = sld [smem:[#allocation2 + $0x302]]
        %v1044 = vstv %s1043
        %v1045 = vmul.f32 %v1044, %v723
        %v1046 = vmul.f32 %v1044, %v724
        %v1049 = vrot.slane %v1045, 6
        %v1050 = vrot.slane %v1049, 4
        %v1051 = vrot.slane %v1046, 6
        %v1052 = vrot.slane %v1051, 4
        %v1055 = vadd.f32 %v1041, %v1050
        %v1056 = vadd.f32 %v1042, %v1052
        %s1057 = sld [smem:[#allocation2 + $0x303]]
        %v1058 = vstv %s1057
        %v1059 = vmul.f32 %v1058, %v723
        %v1060 = vmul.f32 %v1058, %v724
        %v1063 = vrot.slane %v1059, 7
        %v1064 = vrot.slane %v1063, 4
        %v1065 = vrot.slane %v1060, 7
        %v1066 = vrot.slane %v1065, 4
        %v1069 = vadd.f32 %v1055, %v1064
        %v1070 = vadd.f32 %v1056, %v1066
        %s1071 = sld [smem:[#allocation5 + $0x6]]
        %v1072 = vstv %s1071
        %v1073 = vadd.f32 %v1069, %v1072
        %v1074 = vadd.f32 %v1070, %v1072
        %s1075 = sld [smem:[#allocation2 + $0x380]]
        %v1076 = vstv %s1075
        %v1077 = vmul.f32 %v1076, %v723
        %v1078 = vmul.f32 %v1076, %v724
        %s1079 = sld [smem:[#allocation2 + $0x381]]
        %v1080 = vstv %s1079
        %v1081 = vmul.f32 %v1080, %v723
        %v1082 = vmul.f32 %v1080, %v724
        %v1085 = vrot.slane %v1081, 5
        %v1086 = vrot.slane %v1085, 4
        %v1087 = vrot.slane %v1082, 5
        %v1088 = vrot.slane %v1087, 4
        %v1091 = vadd.f32 %v1077, %v1086
        %v1092 = vadd.f32 %v1078, %v1088
        %s1093 = sld [smem:[#allocation2 + $0x382]]
        %v1094 = vstv %s1093
        %v1095 = vmul.f32 %v1094, %v723
        %v1096 = vmul.f32 %v1094, %v724
        %v1099 = vrot.slane %v1095, 6
        %v1100 = vrot.slane %v1099, 4
        %v1101 = vrot.slane %v1096, 6
        %v1102 = vrot.slane %v1101, 4
        %v1105 = vadd.f32 %v1091, %v1100
        %v1106 = vadd.f32 %v1092, %v1102
        %s1107 = sld [smem:[#allocation2 + $0x383]]
        %v1108 = vstv %s1107
        %v1109 = vmul.f32 %v1108, %v723
        %v1110 = vmul.f32 %v1108, %v724
        %v1113 = vrot.slane %v1109, 7
        %v1114 = vrot.slane %v1113, 4
        %v1115 = vrot.slane %v1110, 7
        %v1116 = vrot.slane %v1115, 4
        %v1119 = vadd.f32 %v1105, %v1114
        %v1120 = vadd.f32 %v1106, %v1116
        %s1121 = sld [smem:[#allocation5 + $0x7]]
        %v1122 = vstv %s1121
        %v1123 = vadd.f32 %v1119, %v1122
        %v1124 = vadd.f32 %v1120, %v1122
        %v1127 = vlaneseq
        %v1128 = vshrl.u32 %v1127, 7
        %v1129 = vsub.s32 0, %v1128
        %v1130 = vrot.slane %v773, %v1129
        %v1131 = vlaneseq
        %v1132 = vshrl.u32 %v1131, 7
        %v1133 = vsub.s32 4, %v1132
        %v1134 = vrot.slane %v773, %v1133
        %v1135 = vlaneseq
        %v1136 = vshrl.u32 %v1135, 7
        %v1137 = vsub.s32 0, %v1136
        %v1138 = vrot.slane %v774, %v1137
        %v1144 = vlaneseq
        %v1145 = vshrl.u32 %v1144, 7
        %v1146 = vsub.s32 0, %v1145
        %v1147 = vrot.slane %v823, %v1146
        %v1148 = vlaneseq
        %v1149 = vshrl.u32 %v1148, 7
        %v1150 = vsub.s32 4, %v1149
        %v1151 = vrot.slane %v823, %v1150
        %v1152 = vlaneseq
        %v1153 = vshrl.u32 %v1152, 7
        %v1154 = vsub.s32 0, %v1153
        %v1155 = vrot.slane %v824, %v1154
        %v1161 = vlaneseq
        %v1162 = vshrl.u32 %v1161, 7
        %v1163 = vsub.s32 0, %v1162
        %v1164 = vrot.slane %v873, %v1163
        %v1165 = vlaneseq
        %v1166 = vshrl.u32 %v1165, 7
        %v1167 = vsub.s32 4, %v1166
        %v1168 = vrot.slane %v873, %v1167
        %v1169 = vlaneseq
        %v1170 = vshrl.u32 %v1169, 7
        %v1171 = vsub.s32 0, %v1170
        %v1172 = vrot.slane %v874, %v1171
        %v1178 = vlaneseq
        %v1179 = vshrl.u32 %v1178, 7
        %v1180 = vsub.s32 0, %v1179
        %v1181 = vrot.slane %v923, %v1180
        %v1182 = vlaneseq
        %v1183 = vshrl.u32 %v1182, 7
        %v1184 = vsub.s32 4, %v1183
        %v1185 = vrot.slane %v923, %v1184
        %v1186 = vlaneseq
        %v1187 = vshrl.u32 %v1186, 7
        %v1188 = vsub.s32 0, %v1187
        %v1189 = vrot.slane %v924, %v1188
        %v1195 = vlaneseq
        %v1196 = vshrl.u32 %v1195, 7
        %v1197 = vsub.s32 0, %v1196
        %v1198 = vrot.slane %v973, %v1197
        %v1199 = vlaneseq
        %v1200 = vshrl.u32 %v1199, 7
        %v1201 = vsub.s32 4, %v1200
        %v1202 = vrot.slane %v973, %v1201
        %v1203 = vlaneseq
        %v1204 = vshrl.u32 %v1203, 7
        %v1205 = vsub.s32 0, %v1204
        %v1206 = vrot.slane %v974, %v1205
        %v1212 = vlaneseq
        %v1213 = vshrl.u32 %v1212, 7
        %v1214 = vsub.s32 0, %v1213
        %v1215 = vrot.slane %v1023, %v1214
        %v1216 = vlaneseq
        %v1217 = vshrl.u32 %v1216, 7
        %v1218 = vsub.s32 4, %v1217
        %v1219 = vrot.slane %v1023, %v1218
        %v1220 = vlaneseq
        %v1221 = vshrl.u32 %v1220, 7
        %v1222 = vsub.s32 0, %v1221
        %v1223 = vrot.slane %v1024, %v1222
        %v1229 = vlaneseq
        %v1230 = vshrl.u32 %v1229, 7
        %v1231 = vsub.s32 0, %v1230
        %v1232 = vrot.slane %v1073, %v1231
        %v1233 = vlaneseq
        %v1234 = vshrl.u32 %v1233, 7
        %v1235 = vsub.s32 4, %v1234
        %v1236 = vrot.slane %v1073, %v1235
        %v1237 = vlaneseq
        %v1238 = vshrl.u32 %v1237, 7
        %v1239 = vsub.s32 0, %v1238
        %v1240 = vrot.slane %v1074, %v1239
        %v1246 = vlaneseq
        %v1247 = vshrl.u32 %v1246, 7
        %v1248 = vsub.s32 0, %v1247
        %v1249 = vrot.slane %v1123, %v1248
        %v1250 = vlaneseq
        %v1251 = vshrl.u32 %v1250, 7
        %v1252 = vsub.s32 4, %v1251
        %v1253 = vrot.slane %v1123, %v1252
        %v1254 = vlaneseq
        %v1255 = vshrl.u32 %v1254, 7
        %v1256 = vsub.s32 0, %v1255
        %v1257 = vrot.slane %v1124, %v1256
        %vm1261 = vcmask 1040384
        %v1262 = vsel %vm1261, %v1130, %v1147
        %v1263 = vsel %vm1261, %v1134, %v1151
        %v1264 = vsel %vm1261, %v1138, %v1155
        %vm1265 = vcmask 1041408
        %v1266 = vsel %vm1265, %v1262, %v1164
        %v1267 = vsel %vm1265, %v1263, %v1168
        %v1268 = vsel %vm1265, %v1264, %v1172
        %vm1269 = vcmask 1042432
        %v1270 = vsel %vm1269, %v1266, %v1181
        %v1271 = vsel %vm1269, %v1267, %v1185
        %v1272 = vsel %vm1269, %v1268, %v1189
        %v1273 = vsel %vm373, %v1270, %v1198
        %v1274 = vsel %vm373, %v1271, %v1202
        %v1275 = vsel %vm373, %v1272, %v1206
        %vm1276 = vcmask 1044480
        %v1277 = vsel %vm1276, %v1273, %v1215
        %v1278 = vsel %vm1276, %v1274, %v1219
        %v1279 = vsel %vm1276, %v1275, %v1223
        %vm1280 = vcmask 1045504
        %v1281 = vsel %vm1280, %v1277, %v1232
        %v1282 = vsel %vm1280, %v1278, %v1236
        %v1283 = vsel %vm1280, %v1279, %v1240
        %vm1284 = vcmask 1046528
        %v1285 = vsel %vm1284, %v1281, %v1249
        %v1286 = vsel %vm1284, %v1282, %v1253
        %v1287 = vsel %vm1284, %v1283, %v1257
        %1291 = vrot.lane.b32.xlu0 %v1285, 127
        %v1292 = vpop.permute.xlu0 %1291
        %1293 = vrot.lane.b32.xlu0 %v1286, 127
        %v1294 = vpop.permute.xlu0 %1293
        %1295 = vrot.lane.b32.xlu0 %v1287, 127
        %v1296 = vpop.permute.xlu0 %1295
        %v1297 = vsel %vm653, %v1292, %v1294
        %v1298 = vsel %vm653, %v1294, %v1296
        %1301 = vst [vmem:[%s298] sm:$0xff] %v1297
        %1302 = vst [vmem:[%s298 + $0x8] sm:$0xff] %v1298
        %s1303 = sand.u32 %s183, 1
        %s1304 = scalar_lea.sflag [#allocation3], %s1303
        %s1305 = sand.u32 %s183, 1
        %s1306 = smul.addr %s1305, 16
        %s1307 = scalar_lea.vmem [#allocation7], %s1306
        // Predicated region
        $region57: #{tpu_custom_call.1} parent=47 // pred_check
          %p1308 = pneg %p193
        $region58: #{tpu_custom_call.1} parent=47 // pred_check_branch
          %1310 = sbr.rel (%p1308) target = $region60
        $region59: #{tpu_custom_call.1} parent=47 // pred_region
          %s1312 = ssub.s32 256, 256
          %1313 = vsyncadd %s1304, %s1312
          %s1314 = smul.addr %s23, 2
          %s1315 = smul.addr %s1314, 128
          %s1316 = scalar_lea.hbm %s7, %s1315
          %s1318 = sshll.u32 %s1307, 4
          %s1319 = int_to_ptr.vmem [resolvable:$true] %s1318
          %1321 = dma.vmem_to_hbm [thread:$0]  %s1319, 256, %s1316, %s1304
        $region60: #{tpu_custom_call.1} parent=47 // pred_fallthru
          _
      $region48: #{tpu_custom_call.1} parent=5 // pred_fallthru
        _
      %p1322 = scmp.le.s32.totalorder 2, %s18
      // Predicated region
      $region61: #{tpu_custom_call.1} parent=5 // pred_check
        %p1323 = pneg %p1322
      $region62: #{tpu_custom_call.1} parent=5 // pred_check_branch
        %1325 = sbr.rel (%p1323) target = $region64
      $region63: #{tpu_custom_call.1} parent=5 // pred_region
        %s1326 = ssub.s32 %s18, 2
        // Predicated region
        $region65: #{tpu_custom_call.1} parent=63 // pred_check
          %p1327 = pneg %p199
        $region66: #{tpu_custom_call.1} parent=63 // pred_check_branch
          %1329 = sbr.rel (%p1327) target = $region68
        $region67: #{tpu_custom_call.1} parent=63 // pred_region
          %s1330 = sand.u32 %s184, 1
          %s1331 = scalar_lea.sflag [#allocation3], %s1330
          %s1332 = sand.u32 %s184, 1
          %s1333 = smul.addr %s1332, 16
          %s1334 = scalar_lea.vmem [#allocation7], %s1333
          %1335 = dma.done %s1331, 256
        $region68: #{tpu_custom_call.1} parent=63 // pred_fallthru
          _
      $region64: #{tpu_custom_call.1} parent=5 // pred_fallthru
        _
    $region6: #{tpu_custom_call.1} parent=1 // loop_footer
      %s22 = sadd.s32 1, %s18
    $region7: #{tpu_custom_call.1} parent=1 // loop_footer_branch
      %17 = sbr.rel target = $region3
    $region8: #{tpu_custom_call.1} parent=1 // loop_exit
      _
    %1336 = vsyncpa [#allocation3], 1
    %s1337 = scalar_lea.sflag [#allocation3], 1
    %1338 = vsyncpa %s1337, 1
    %1339 = vsyncpa [#allocation4], 1
    %s1340 = scalar_lea.sflag [#allocation4], 1
    %1341 = vsyncpa %s1340, 1
    %1342 = vsyncpa [#allocation6], 1

</llo_original>
